<compile_context>
chip_gen: v7x
topology: tpu7x:2x2x1
jax: 0.10.0
libtpu: 0.0.40
codegen_flags: <defaults>
</compile_context>

<pallas_src>
import jax
import jax.numpy as jnp
from jax.experimental import pallas as pl
from jax.experimental.pallas import tpu as pltpu

_SUBLANE = 8                 # f32 sublane packing (second-to-last dim)
_TM_MAX = 8192               # max M-tile rows (few MiB of VMEM at F=N=32)
_PALLAS_MIN_ELEMS = 1 << 16  # below this many activation elements, use jnp


def _round_up(x, m):
    return ((x + m - 1) // m) * m


def _encoder_kernel(h_ref, w_ref, b_ref, o_ref):
    # (TM, F) f32 @ (F, N) f32 -> f32 on the MXU, then bias + ReLU epilogue.
    acc = jnp.dot(h_ref[...], w_ref[...], preferred_element_type=jnp.float32)
    o_ref[...] = jnp.maximum(acc + b_ref[...], 0.0)   # (1, N) bias broadcasts


def _encode_flat(history_flat, w, b):
    """history_flat: (M, F) f32; w: (F, N) f32; b: (1, N) f32 -> (M, N) f32."""
    M, F = history_flat.shape
    N = w.shape[1]

    # Small-M fast path: kernel launch + pipeline prologue would dominate.
    if M * F < _PALLAS_MIN_ELEMS:
        return jnp.maximum(history_flat @ w + b, 0.0)

    # M tile: multiple of 8 sublanes, capped so grid_m >= 2 (v7x megacore).
    TM = min(_TM_MAX, _round_up(pl.cdiv(M, 2), _SUBLANE))
    grid_m = pl.cdiv(M, TM)

    return pl.pallas_call(
        _encoder_kernel,
        out_shape=jax.ShapeDtypeStruct((M, N), jnp.float32),
        grid=(grid_m,),
        in_specs=[
            # Streamed activation tiles; F equals the full last dim -> legal
            # block without any lane padding.
            pl.BlockSpec((TM, F), lambda i: (i, 0)),
            # VMEM-resident weights / bias (same block every step).
            pl.BlockSpec((F, N), lambda i: (0, 0)),
            pl.BlockSpec((1, N), lambda i: (0, 0)),
        ],
        out_specs=pl.BlockSpec((TM, N), lambda i: (i, 0)),
        compiler_params=pltpu.CompilerParams(
            # Independent M tiles: shard across both TCs on v7x; harmless on
            # single-TC v5e/v6e.
            dimension_semantics=("parallel",)),
        cost_estimate=pl.CostEstimate(
            flops=2 * M * F * N,
            transcendentals=0,
            bytes_accessed=(M * F + F * N + N + M * N) * 4),
    )(history_flat, w, b)


class IEncoder:
    """JAX/Pallas port of the PyTorch IEncoder interface."""

    def __init__(self, cfg, out_features=32, key=jax.random.PRNGKey(0)):
        self.n_history = cfg['history_count']
        self.n_features = cfg['history_features']
        self._out = out_features
        kw, kb = jax.random.split(key)
        # Deterministic synthetic parameters (no checkpoint load); kept f32.
        self.w = (jax.random.normal(kw, (self.n_features, self._out),
                                    dtype=jnp.float32)
                  * (1.0 / jnp.sqrt(self.n_features)))
        self.b = jax.random.normal(kb, (1, self._out),
                                   dtype=jnp.float32) * 0.01

    # ---- concrete bookkeeping from the reference module ----
    def out_size(self):
        return self._out

    def count(self):
        return self.n_history

    def total_size(self):
        return self.out_size() * self.count()

    def has_features(self):
        return False

    # ---- forward (abstract in the reference; minimal concrete body) ----
    def forward(self, states, history):
        # history: (B, ..., n_features) -> (B, T, n_features)
        B = history.shape[0]
        hist = jnp.reshape(history, (B, -1, self.n_features)).astype(jnp.float32)
        T = hist.shape[1]
        flat = jnp.reshape(hist, (B * T, self.n_features))
        out = _encode_flat(flat, self.w, self.b)          # (B*T, out)
        return jnp.reshape(out, (B, T, self._out))

    # ---- extract_features: exact semantics of the reference ----
    def extract_features(self, states):
        B = states.shape[0]
        feats = jnp.zeros((B, 1, 1, self.n_features), dtype=jnp.float32)
        return self.forward(states, feats)                # (B, 1, out)


if __name__ == "__main__":
    cfg = {'history_count': 8, 'history_features': 32}
    enc = IEncoder(cfg, out_features=32, key=jax.random.PRNGKey(0))

    key = jax.random.PRNGKey(0)
    ks, kh, ks2, kh2 = jax.random.split(key, 4)

    # Small demo shapes consistent with the module (B=2, T=8, F=32).
    B = 2
    states = jax.random.normal(ks, (B, 16), dtype=jnp.float32)
    history = jax.random.normal(
        kh, (B, cfg['history_count'], cfg['history_features']),
        dtype=jnp.float32)
    y_small = enc.forward(states, history)        # (2, 8, 32)  jnp fast path
    z = enc.extract_features(states)              # (2, 1, 32)

    # Larger history so the Pallas path (grid_m >= 2) is exercised.
    B2, T2 = 8, 512                                # M = 4096 -> TM=2048, grid=2
    states_big = jax.random.normal(ks2, (B2, 16), dtype=jnp.float32)
    history_big = jax.random.normal(
        kh2, (B2, T2, cfg['history_features']), dtype=jnp.float32)
    y_big = enc.forward(states_big, history_big)   # (8, 512, 32) via Pallas

    jax.block_until_ready(y_small)
    jax.block_until_ready(z)
    jax.block_until_ready(y_big)

    # bookkeeping matches reference semantics
    assert enc.total_size() == enc.out_size() * enc.count()
    assert y_small.shape == (B, cfg['history_count'], enc.out_size())
    assert z.shape == (B, 1, enc.out_size())
    assert y_big.shape == (B2, T2, enc.out_size())

    # numeric check vs. pure-JAX f32 reference
    flat_s = history.reshape(-1, cfg['history_features'])
    ref_s = jnp.maximum(flat_s @ enc.w + enc.b, 0.0).reshape(y_small.shape)
    assert jnp.max(jnp.abs(y_small - ref_s)) < 1e-5, "small-path mismatch"

    flat_b = history_big.reshape(-1, cfg['history_features'])
    ref_b = jnp.maximum(flat_b @ enc.w + enc.b, 0.0).reshape(y_big.shape)
    assert jnp.max(jnp.abs(y_big - ref_b)) < 2e-2, "kernel mismatch vs reference"

    # extract_features must equal forward on an explicit zero feature tensor
    zref = enc.forward(states, jnp.zeros((B, 1, 1, cfg['history_features']),
                                         dtype=jnp.float32))
    assert jnp.max(jnp.abs(z - zref)) < 1e-6

    print("KERNEL_OK")
</pallas_src>

<mosaic_0001>
module attributes {stable_mosaic.version = 11 : i64} {
  func.func @_encoder_kernel(%arg0: i32, %arg1: memref<2048x32xf32, #tpu.memory_space<vmem>>, %arg2: memref<32x32xf32, #tpu.memory_space<vmem>>, %arg3: memref<1x32xf32, #tpu.memory_space<vmem>>, %arg4: memref<2048x32xf32, #tpu.memory_space<vmem>>) attributes {dimension_semantics = [#tpu.dimension_semantics<parallel>], iteration_bounds = array<i64: 2>, scalar_prefetch = 0 : i64, scratch_operands = 0 : i64, tpu.core_type = #tpu.core_type<tc>, window_params = [{transform_indices = @transform_0, window_bounds = array<i64: 2048, 32>}, {pipeline_mode = #tpu.pipeline_mode<synchronous>, transform_indices = @transform_1, window_bounds = array<i64: 32, 32>}, {pipeline_mode = #tpu.pipeline_mode<synchronous>, transform_indices = @transform_2, window_bounds = array<i64: 1, 32>}, {transform_indices = @transform_3, window_bounds = array<i64: 2048, 32>}]} {
    %c0 = arith.constant 0 : index
    %c0_0 = arith.constant 0 : index
    %0 = vector.load %arg1[%c0, %c0_0] : memref<2048x32xf32, #tpu.memory_space<vmem>>, vector<2048x32xf32>
    %c0_1 = arith.constant 0 : index
    %c0_2 = arith.constant 0 : index
    %1 = vector.load %arg2[%c0_1, %c0_2] : memref<32x32xf32, #tpu.memory_space<vmem>>, vector<32x32xf32>
    %cst = arith.constant dense<0.000000e+00> : vector<2048x32xf32>
    %2 = tpu.matmul %0, %1, %cst {dimension_numbers = #tpu.dot_dimension_numbers<[1], [0], [0], [1], [0, 0, 1, 1], [], []>} : vector<2048x32xf32>, vector<32x32xf32>, vector<2048x32xf32> -> vector<2048x32xf32>
    %c0_3 = arith.constant 0 : index
    %c0_4 = arith.constant 0 : index
    %3 = vector.load %arg3[%c0_3, %c0_4] : memref<1x32xf32, #tpu.memory_space<vmem>>, vector<1x32xf32>
    %4 = vector.broadcast %3 : vector<1x32xf32> to vector<2048x32xf32>
    %5 = arith.addf %2, %4 : vector<2048x32xf32>
    %cst_5 = arith.constant 0.000000e+00 : f32
    %6 = vector.broadcast %cst_5 : f32 to vector<2048x32xf32>
    %7 = arith.maximumf %5, %6 : vector<2048x32xf32>
    %c0_6 = arith.constant 0 : index
    %c0_7 = arith.constant 0 : index
    %8 = vector.load %arg4[%c0_6, %c0_7] : memref<2048x32xf32, #tpu.memory_space<vmem>>, vector<2048x32xf32>
    tpu.vector_store %arg4[%c0_6, %c0_7], %7 {strides = array<i32>} : memref<2048x32xf32, #tpu.memory_space<vmem>>, vector<2048x32xf32>,
    return
  }
  func.func @transform_0(%arg0: i32) -> (i32, i32) {
    %c0_i32 = arith.constant 0 : i32
    %c0_i32_0 = arith.constant 0 : i32
    return %arg0, %c0_i32 : i32, i32
  }
  func.func @transform_1(%arg0: i32) -> (i32, i32) {
    %c0_i32 = arith.constant 0 : i32
    %c0_i32_0 = arith.constant 0 : i32
    %c0_i32_1 = arith.constant 0 : i32
    return %c0_i32, %c0_i32_0 : i32, i32
  }
  func.func @transform_2(%arg0: i32) -> (i32, i32) {
    %c0_i32 = arith.constant 0 : i32
    %c0_i32_0 = arith.constant 0 : i32
    %c0_i32_1 = arith.constant 0 : i32
    return %c0_i32, %c0_i32_0 : i32, i32
  }
  func.func @transform_3(%arg0: i32) -> (i32, i32) {
    %c0_i32 = arith.constant 0 : i32
    %c0_i32_0 = arith.constant 0 : i32
    return %arg0, %c0_i32 : i32, i32
  }
}

</mosaic_0001>

<llo_original>
// kernel: tpu_custom_call.1
$region0: #{tpu_custom_call.1}
  #allocation0 [shape = 'u32[]', space=smem, size = 0x4, offset = 0x4, fixed_abs, tag = 'smem constant byte address 0x4 - core index']
  #allocation1 [shape = 'u32[144,128]{1,0:T(1,128)}', space=vmem, size = 0x12000, scoped, tag = 'internal scratch']
  %s0 = inlined_call_operand.vmem [shape: f32[4096,32], index: 0, kind: input, shape index: {}]
  %s1 = inlined_call_operand.vmem [shape: f32[32,32], index: 1, kind: input, shape index: {}]
  %s2 = inlined_call_operand.vmem [shape: f32[1,32], index: 2, kind: input, shape index: {}]
  %s3 = inlined_call_operand.vmem [shape: f32[4096,32], index: 3, kind: output, shape index: {}]
  %s4 = sld [smem:[#allocation0]]
  $region45: #{tpu_custom_call.1} parent=0
    _
  %s6 = ssub.s32 1, %s4
  %s7 = scalar_select 0, %s6, %s4
  loop: start=0, step=1, limit=4
  $region2: #{tpu_custom_call.1} parent=0 // loop_pre_header
    _
  $region3: #{tpu_custom_call.1} parent=0 // loop_header
    %s9 = sphi 0, %s13
    %p10 = scmp.ge.s32.totalorder %s9, 4
    %s19 = sphi 0, %s21
    %s22 = sphi 0, %s19
    %s23 = sphi 0, %s22
    %s39 = sphi 0, %s23
    %s43 = sphi 0, %s43
    %s45 = sphi 0, %s43
    %s46 = sphi 0, %s45
    %s60 = sphi 0, %s46
    %s64 = sphi 0, %s64
    %s66 = sphi 0, %s64
    %s67 = sphi 0, %s66
    %s81 = sphi 0, %s67
    %s87 = sphi 0, %s89
    %s90 = sphi 0, %s87
    %s91 = sphi 0, %s90
    %s107 = sphi 0, %s91
  $region4: #{tpu_custom_call.1} parent=0 // loop_header_branch
    %12 = sbr.rel (%p10) target = $region8
  $region5: #{tpu_custom_call.1} parent=0 // loop_body
    %s14 = ssub.s32 %s9, 1
    %s15 = ssub.s32 %s9, 2
    %s16 = sadd.s32 %s9, 1
    %s17 = ssub.s32 %s9, %s16
    %p18 = scmp.eq.s32.totalorder %s17, 0
    %s20 = sadd.s32 %s19, 1
    %s21 = scalar_select %p18, %s19, %s20
    %p24 = pneg %p18
    %p25 = scmp.eq.s32.totalorder %s9, 1
    %p26 = por %p24, %p25
    %p27 = scmp.ne.s32.totalorder %s19, %s22
    %p28 = scmp.eq.s32.totalorder %s9, 0
    %p29 = por %p27, %p28
    %p30 = scmp.ne.s32.totalorder %s19, %s22
    %p31 = scmp.eq.s32.totalorder %s14, 1
    %p32 = por %p30, %p31
    %p33 = scmp.ne.s32.totalorder %s22, %s23
    %p34 = scmp.eq.s32.totalorder %s14, 0
    %p35 = por %p33, %p34
    %p36 = scmp.ne.s32.totalorder %s22, %s23
    %p37 = scmp.eq.s32.totalorder %s15, 1
    %p38 = por %p36, %p37
    %p40 = scmp.ne.s32.totalorder %s23, %s39
    %p41 = scmp.eq.s32.totalorder %s15, 0
    %p42 = por %p40, %p41
    %s44 = sadd.s32 %s43, 1
    %p47 = scmp.eq.s32.totalorder %s9, 1
    %p48 = scmp.ne.s32.totalorder %s43, %s45
    %p49 = scmp.eq.s32.totalorder %s9, 0
    %p50 = por %p48, %p49
    %p51 = scmp.ne.s32.totalorder %s43, %s45
    %p52 = scmp.eq.s32.totalorder %s14, 1
    %p53 = por %p51, %p52
    %p54 = scmp.ne.s32.totalorder %s45, %s46
    %p55 = scmp.eq.s32.totalorder %s14, 0
    %p56 = por %p54, %p55
    %p57 = scmp.ne.s32.totalorder %s45, %s46
    %p58 = scmp.eq.s32.totalorder %s15, 1
    %p59 = por %p57, %p58
    %p61 = scmp.ne.s32.totalorder %s46, %s60
    %p62 = scmp.eq.s32.totalorder %s15, 0
    %p63 = por %p61, %p62
    %s65 = sadd.s32 %s64, 1
    %p68 = scmp.eq.s32.totalorder %s9, 1
    %p69 = scmp.ne.s32.totalorder %s64, %s66
    %p70 = scmp.eq.s32.totalorder %s9, 0
    %p71 = por %p69, %p70
    %p72 = scmp.ne.s32.totalorder %s64, %s66
    %p73 = scmp.eq.s32.totalorder %s14, 1
    %p74 = por %p72, %p73
    %p75 = scmp.ne.s32.totalorder %s66, %s67
    %p76 = scmp.eq.s32.totalorder %s14, 0
    %p77 = por %p75, %p76
    %p78 = scmp.ne.s32.totalorder %s66, %s67
    %p79 = scmp.eq.s32.totalorder %s15, 1
    %p80 = por %p78, %p79
    %p82 = scmp.ne.s32.totalorder %s67, %s81
    %p83 = scmp.eq.s32.totalorder %s15, 0
    %p84 = por %p82, %p83
    %s85 = ssub.s32 %s9, %s16
    %p86 = scmp.eq.s32.totalorder %s85, 0
    %s88 = sadd.s32 %s87, 1
    %s89 = scalar_select %p86, %s87, %s88
    %p92 = pneg %p86
    %p93 = scmp.eq.s32.totalorder %s9, 1
    %p94 = por %p92, %p93
    %p95 = scmp.ne.s32.totalorder %s87, %s90
    %p96 = scmp.eq.s32.totalorder %s9, 0
    %p97 = por %p95, %p96
    %p98 = scmp.ne.s32.totalorder %s87, %s90
    %p99 = scmp.eq.s32.totalorder %s14, 1
    %p100 = por %p98, %p99
    %p101 = scmp.ne.s32.totalorder %s90, %s91
    %p102 = scmp.eq.s32.totalorder %s14, 0
    %p103 = por %p101, %p102
    %p104 = scmp.ne.s32.totalorder %s90, %s91
    %p105 = scmp.eq.s32.totalorder %s15, 1
    %p106 = por %p104, %p105
    %p108 = scmp.ne.s32.totalorder %s91, %s107
    %p109 = scmp.eq.s32.totalorder %s15, 0
    %p110 = por %p108, %p109
    %p111 = scmp.le.s32.totalorder 1, %s9
    %p112 = scmp.lt.s32.totalorder %s9, 3
    %p113 = pnand %p111, %p112
    %p114 = pneg %p113
    // Predicated region
    $region9: #{tpu_custom_call.1} parent=5 // pred_check
      _
    $region10: #{tpu_custom_call.1} parent=5 // pred_check_branch
      %116 = sbr.rel (%p113) target = $region12
    $region11: #{tpu_custom_call.1} parent=5 // pred_region
      %s117 = ssub.s32 %s9, 1
      // Predicated region
      $region13: #{tpu_custom_call.1} parent=11 // pred_check
        %p118 = pneg %p56
      $region14: #{tpu_custom_call.1} parent=11 // pred_check_branch
        %120 = sbr.rel (%p118) target = $region16
      $region15: #{tpu_custom_call.1} parent=11 // pred_region
        _
      $region16: #{tpu_custom_call.1} parent=11 // pred_fallthru
        _
      // Predicated region
      $region17: #{tpu_custom_call.1} parent=11 // pred_check
        %p121 = pneg %p77
      $region18: #{tpu_custom_call.1} parent=11 // pred_check_branch
        %123 = sbr.rel (%p121) target = $region20
      $region19: #{tpu_custom_call.1} parent=11 // pred_region
        _
      $region20: #{tpu_custom_call.1} parent=11 // pred_fallthru
        _
    $region12: #{tpu_custom_call.1} parent=5 // pred_fallthru
      _
    %p124 = scmp.lt.s32.totalorder %s9, 2
    // Predicated region
    $region21: #{tpu_custom_call.1} parent=5 // pred_check
      %p125 = pneg %p124
    $region22: #{tpu_custom_call.1} parent=5 // pred_check_branch
      %127 = sbr.rel (%p125) target = $region24
    $region23: #{tpu_custom_call.1} parent=5 // pred_region
      // Predicated region
      $region25: #{tpu_custom_call.1} parent=23 // pred_check
        %p128 = pneg %p29
      $region26: #{tpu_custom_call.1} parent=23 // pred_check_branch
        %130 = sbr.rel (%p128) target = $region28
      $region27: #{tpu_custom_call.1} parent=23 // pred_region
        %s131 = smul.u32 256, %s9
        %p132 = scmp.lt.s32.totalorder %s131, 511
        %s133 = scalar_select %p132, %s131, 511
        %s134 = smul.addr %s133, 8
        %s135 = scalar_lea.vmem %s0, %s134
        %s136 = smul.u32 256, %s9
      $region28: #{tpu_custom_call.1} parent=23 // pred_fallthru
        _
    $region24: #{tpu_custom_call.1} parent=5 // pred_fallthru
      _
    %p137 = scmp.le.s32.totalorder 1, %s9
    %p138 = scmp.lt.s32.totalorder %s9, 3
    %p139 = pnand %p137, %p138
    %p140 = pneg %p139
    // Predicated region
    $region29: #{tpu_custom_call.1} parent=5 // pred_check
      _
    $region30: #{tpu_custom_call.1} parent=5 // pred_check_branch
      %142 = sbr.rel (%p139) target = $region32
    $region31: #{tpu_custom_call.1} parent=5 // pred_region
      %s143 = ssub.s32 %s9, 1
      %s144 = smul.u32 256, %s14
      %p145 = scmp.lt.s32.totalorder %s144, 511
      %s146 = scalar_select %p145, %s144, 511
      %s147 = smul.addr %s146, 8
      %s148 = scalar_lea.vmem %s0, %s147
      %p149 = pneg %p35
      %p150 = pneg %p32
      %p151 = pneg %p56
      %p152 = pneg %p53
      %p153 = pneg %p77
      %p154 = pneg %p74
      %p155 = pneg %p103
      %p156 = pneg %p100
      %s157 = smul.u32 256, %s14
      %p158 = scmp.lt.s32.totalorder %s157, 511
      %s159 = scalar_select %p158, %s157, 511
      %s160 = smul.addr %s159, 8
      %s161 = scalar_lea.vmem %s3, %s160
      %s162 = smul.u32 256, %s14
      %p163 = scmp.lt.s32.totalorder %s162, 511
      %s164 = scalar_select %p163, %s162, 511
      %s165 = smul.addr %s164, 8
      %s166 = scalar_lea.vmem %s0, %s165
      %s167 = smul.u32 256, %s14
      %s168 = smul.u32 256, %s14
      %p169 = scmp.lt.s32.totalorder %s168, 511
      %s170 = scalar_select %p169, %s168, 511
      %s171 = smul.addr %s170, 8
      %s172 = scalar_lea.vmem %s3, %s171
      %s173 = smul.u32 256, %s14
      %v174 = vld [vmem:[%s166] sm:$0xff]
      %v175 = vld [vmem:[%s166 + $0x8] sm:$0xff]
      %v176 = vld [vmem:[%s166 + $0x10] sm:$0xff]
      %v177 = vld [vmem:[%s166 + $0x18] sm:$0xff]
      %v178 = vld [vmem:[%s166 + $0x20] sm:$0xff]
      %v179 = vld [vmem:[%s166 + $0x28] sm:$0xff]
      %v180 = vld [vmem:[%s166 + $0x30] sm:$0xff]
      %v181 = vld [vmem:[%s166 + $0x38] sm:$0xff]
      %v182 = vld [vmem:[%s166 + $0x40] sm:$0xff]
      %v183 = vld [vmem:[%s166 + $0x48] sm:$0xff]
      %v184 = vld [vmem:[%s166 + $0x50] sm:$0xff]
      %v185 = vld [vmem:[%s166 + $0x58] sm:$0xff]
      %v186 = vld [vmem:[%s166 + $0x60] sm:$0xff]
      %v187 = vld [vmem:[%s166 + $0x68] sm:$0xff]
      %v188 = vld [vmem:[%s166 + $0x70] sm:$0xff]
      %v189 = vld [vmem:[%s166 + $0x78] sm:$0xff]
      %v190 = vld [vmem:[%s166 + $0x80] sm:$0xff]
      %v191 = vld [vmem:[%s166 + $0x88] sm:$0xff]
      %v192 = vld [vmem:[%s166 + $0x90] sm:$0xff]
      %v193 = vld [vmem:[%s166 + $0x98] sm:$0xff]
      %v194 = vld [vmem:[%s166 + $0xa0] sm:$0xff]
      %v195 = vld [vmem:[%s166 + $0xa8] sm:$0xff]
      %v196 = vld [vmem:[%s166 + $0xb0] sm:$0xff]
      %v197 = vld [vmem:[%s166 + $0xb8] sm:$0xff]
      %v198 = vld [vmem:[%s166 + $0xc0] sm:$0xff]
      %v199 = vld [vmem:[%s166 + $0xc8] sm:$0xff]
      %v200 = vld [vmem:[%s166 + $0xd0] sm:$0xff]
      %v201 = vld [vmem:[%s166 + $0xd8] sm:$0xff]
      %v202 = vld [vmem:[%s166 + $0xe0] sm:$0xff]
      %v203 = vld [vmem:[%s166 + $0xe8] sm:$0xff]
      %v204 = vld [vmem:[%s166 + $0xf0] sm:$0xff]
      %v205 = vld [vmem:[%s166 + $0xf8] sm:$0xff]
      %v206 = vld [vmem:[%s166 + $0x100] sm:$0xff]
      %v207 = vld [vmem:[%s166 + $0x108] sm:$0xff]
      %v208 = vld [vmem:[%s166 + $0x110] sm:$0xff]
      %v209 = vld [vmem:[%s166 + $0x118] sm:$0xff]
      %v210 = vld [vmem:[%s166 + $0x120] sm:$0xff]
      %v211 = vld [vmem:[%s166 + $0x128] sm:$0xff]
      %v212 = vld [vmem:[%s166 + $0x130] sm:$0xff]
      %v213 = vld [vmem:[%s166 + $0x138] sm:$0xff]
      %v214 = vld [vmem:[%s166 + $0x140] sm:$0xff]
      %v215 = vld [vmem:[%s166 + $0x148] sm:$0xff]
      %v216 = vld [vmem:[%s166 + $0x150] sm:$0xff]
      %v217 = vld [vmem:[%s166 + $0x158] sm:$0xff]
      %v218 = vld [vmem:[%s166 + $0x160] sm:$0xff]
      %v219 = vld [vmem:[%s166 + $0x168] sm:$0xff]
      %v220 = vld [vmem:[%s166 + $0x170] sm:$0xff]
      %v221 = vld [vmem:[%s166 + $0x178] sm:$0xff]
      %v222 = vld [vmem:[%s166 + $0x180] sm:$0xff]
      %v223 = vld [vmem:[%s166 + $0x188] sm:$0xff]
      %v224 = vld [vmem:[%s166 + $0x190] sm:$0xff]
      %v225 = vld [vmem:[%s166 + $0x198] sm:$0xff]
      %v226 = vld [vmem:[%s166 + $0x1a0] sm:$0xff]
      %v227 = vld [vmem:[%s166 + $0x1a8] sm:$0xff]
      %v228 = vld [vmem:[%s166 + $0x1b0] sm:$0xff]
      %v229 = vld [vmem:[%s166 + $0x1b8] sm:$0xff]
      %v230 = vld [vmem:[%s166 + $0x1c0] sm:$0xff]
      %v231 = vld [vmem:[%s166 + $0x1c8] sm:$0xff]
      %v232 = vld [vmem:[%s166 + $0x1d0] sm:$0xff]
      %v233 = vld [vmem:[%s166 + $0x1d8] sm:$0xff]
      %v234 = vld [vmem:[%s166 + $0x1e0] sm:$0xff]
      %v235 = vld [vmem:[%s166 + $0x1e8] sm:$0xff]
      %v236 = vld [vmem:[%s166 + $0x1f0] sm:$0xff]
      %v237 = vld [vmem:[%s166 + $0x1f8] sm:$0xff]
      %v238 = vld [vmem:[%s166 + $0x200] sm:$0xff]
      %v239 = vld [vmem:[%s166 + $0x208] sm:$0xff]
      %v240 = vld [vmem:[%s166 + $0x210] sm:$0xff]
      %v241 = vld [vmem:[%s166 + $0x218] sm:$0xff]
      %v242 = vld [vmem:[%s166 + $0x220] sm:$0xff]
      %v243 = vld [vmem:[%s166 + $0x228] sm:$0xff]
      %v244 = vld [vmem:[%s166 + $0x230] sm:$0xff]
      %v245 = vld [vmem:[%s166 + $0x238] sm:$0xff]
      %v246 = vld [vmem:[%s166 + $0x240] sm:$0xff]
      %v247 = vld [vmem:[%s166 + $0x248] sm:$0xff]
      %v248 = vld [vmem:[%s166 + $0x250] sm:$0xff]
      %v249 = vld [vmem:[%s166 + $0x258] sm:$0xff]
      %v250 = vld [vmem:[%s166 + $0x260] sm:$0xff]
      %v251 = vld [vmem:[%s166 + $0x268] sm:$0xff]
      %v252 = vld [vmem:[%s166 + $0x270] sm:$0xff]
      %v253 = vld [vmem:[%s166 + $0x278] sm:$0xff]
      %v254 = vld [vmem:[%s166 + $0x280] sm:$0xff]
      %v255 = vld [vmem:[%s166 + $0x288] sm:$0xff]
      %v256 = vld [vmem:[%s166 + $0x290] sm:$0xff]
      %v257 = vld [vmem:[%s166 + $0x298] sm:$0xff]
      %v258 = vld [vmem:[%s166 + $0x2a0] sm:$0xff]
      %v259 = vld [vmem:[%s166 + $0x2a8] sm:$0xff]
      %v260 = vld [vmem:[%s166 + $0x2b0] sm:$0xff]
      %v261 = vld [vmem:[%s166 + $0x2b8] sm:$0xff]
      %v262 = vld [vmem:[%s166 + $0x2c0] sm:$0xff]
      %v263 = vld [vmem:[%s166 + $0x2c8] sm:$0xff]
      %v264 = vld [vmem:[%s166 + $0x2d0] sm:$0xff]
      %v265 = vld [vmem:[%s166 + $0x2d8] sm:$0xff]
      %v266 = vld [vmem:[%s166 + $0x2e0] sm:$0xff]
      %v267 = vld [vmem:[%s166 + $0x2e8] sm:$0xff]
      %v268 = vld [vmem:[%s166 + $0x2f0] sm:$0xff]
      %v269 = vld [vmem:[%s166 + $0x2f8] sm:$0xff]
      %v270 = vld [vmem:[%s166 + $0x300] sm:$0xff]
      %v271 = vld [vmem:[%s166 + $0x308] sm:$0xff]
      %v272 = vld [vmem:[%s166 + $0x310] sm:$0xff]
      %v273 = vld [vmem:[%s166 + $0x318] sm:$0xff]
      %v274 = vld [vmem:[%s166 + $0x320] sm:$0xff]
      %v275 = vld [vmem:[%s166 + $0x328] sm:$0xff]
      %v276 = vld [vmem:[%s166 + $0x330] sm:$0xff]
      %v277 = vld [vmem:[%s166 + $0x338] sm:$0xff]
      %v278 = vld [vmem:[%s166 + $0x340] sm:$0xff]
      %v279 = vld [vmem:[%s166 + $0x348] sm:$0xff]
      %v280 = vld [vmem:[%s166 + $0x350] sm:$0xff]
      %v281 = vld [vmem:[%s166 + $0x358] sm:$0xff]
      %v282 = vld [vmem:[%s166 + $0x360] sm:$0xff]
      %v283 = vld [vmem:[%s166 + $0x368] sm:$0xff]
      %v284 = vld [vmem:[%s166 + $0x370] sm:$0xff]
      %v285 = vld [vmem:[%s166 + $0x378] sm:$0xff]
      %v286 = vld [vmem:[%s166 + $0x380] sm:$0xff]
      %v287 = vld [vmem:[%s166 + $0x388] sm:$0xff]
      %v288 = vld [vmem:[%s166 + $0x390] sm:$0xff]
      %v289 = vld [vmem:[%s166 + $0x398] sm:$0xff]
      %v290 = vld [vmem:[%s166 + $0x3a0] sm:$0xff]
      %v291 = vld [vmem:[%s166 + $0x3a8] sm:$0xff]
      %v292 = vld [vmem:[%s166 + $0x3b0] sm:$0xff]
      %v293 = vld [vmem:[%s166 + $0x3b8] sm:$0xff]
      %v294 = vld [vmem:[%s166 + $0x3c0] sm:$0xff]
      %v295 = vld [vmem:[%s166 + $0x3c8] sm:$0xff]
      %v296 = vld [vmem:[%s166 + $0x3d0] sm:$0xff]
      %v297 = vld [vmem:[%s166 + $0x3d8] sm:$0xff]
      %v298 = vld [vmem:[%s166 + $0x3e0] sm:$0xff]
      %v299 = vld [vmem:[%s166 + $0x3e8] sm:$0xff]
      %v300 = vld [vmem:[%s166 + $0x3f0] sm:$0xff]
      %v301 = vld [vmem:[%s166 + $0x3f8] sm:$0xff]
      %v302 = vld [vmem:[%s166 + $0x400] sm:$0xff]
      %v303 = vld [vmem:[%s166 + $0x408] sm:$0xff]
      %v304 = vld [vmem:[%s166 + $0x410] sm:$0xff]
      %v305 = vld [vmem:[%s166 + $0x418] sm:$0xff]
      %v306 = vld [vmem:[%s166 + $0x420] sm:$0xff]
      %v307 = vld [vmem:[%s166 + $0x428] sm:$0xff]
      %v308 = vld [vmem:[%s166 + $0x430] sm:$0xff]
      %v309 = vld [vmem:[%s166 + $0x438] sm:$0xff]
      %v310 = vld [vmem:[%s166 + $0x440] sm:$0xff]
      %v311 = vld [vmem:[%s166 + $0x448] sm:$0xff]
      %v312 = vld [vmem:[%s166 + $0x450] sm:$0xff]
      %v313 = vld [vmem:[%s166 + $0x458] sm:$0xff]
      %v314 = vld [vmem:[%s166 + $0x460] sm:$0xff]
      %v315 = vld [vmem:[%s166 + $0x468] sm:$0xff]
      %v316 = vld [vmem:[%s166 + $0x470] sm:$0xff]
      %v317 = vld [vmem:[%s166 + $0x478] sm:$0xff]
      %v318 = vld [vmem:[%s166 + $0x480] sm:$0xff]
      %v319 = vld [vmem:[%s166 + $0x488] sm:$0xff]
      %v320 = vld [vmem:[%s166 + $0x490] sm:$0xff]
      %v321 = vld [vmem:[%s166 + $0x498] sm:$0xff]
      %v322 = vld [vmem:[%s166 + $0x4a0] sm:$0xff]
      %v323 = vld [vmem:[%s166 + $0x4a8] sm:$0xff]
      %v324 = vld [vmem:[%s166 + $0x4b0] sm:$0xff]
      %v325 = vld [vmem:[%s166 + $0x4b8] sm:$0xff]
      %v326 = vld [vmem:[%s166 + $0x4c0] sm:$0xff]
      %v327 = vld [vmem:[%s166 + $0x4c8] sm:$0xff]
      %v328 = vld [vmem:[%s166 + $0x4d0] sm:$0xff]
      %v329 = vld [vmem:[%s166 + $0x4d8] sm:$0xff]
      %v330 = vld [vmem:[%s166 + $0x4e0] sm:$0xff]
      %v331 = vld [vmem:[%s166 + $0x4e8] sm:$0xff]
      %v332 = vld [vmem:[%s166 + $0x4f0] sm:$0xff]
      %v333 = vld [vmem:[%s166 + $0x4f8] sm:$0xff]
      %v334 = vld [vmem:[%s166 + $0x500] sm:$0xff]
      %v335 = vld [vmem:[%s166 + $0x508] sm:$0xff]
      %v336 = vld [vmem:[%s166 + $0x510] sm:$0xff]
      %v337 = vld [vmem:[%s166 + $0x518] sm:$0xff]
      %v338 = vld [vmem:[%s166 + $0x520] sm:$0xff]
      %v339 = vld [vmem:[%s166 + $0x528] sm:$0xff]
      %v340 = vld [vmem:[%s166 + $0x530] sm:$0xff]
      %v341 = vld [vmem:[%s166 + $0x538] sm:$0xff]
      %v342 = vld [vmem:[%s166 + $0x540] sm:$0xff]
      %v343 = vld [vmem:[%s166 + $0x548] sm:$0xff]
      %v344 = vld [vmem:[%s166 + $0x550] sm:$0xff]
      %v345 = vld [vmem:[%s166 + $0x558] sm:$0xff]
      %v346 = vld [vmem:[%s166 + $0x560] sm:$0xff]
      %v347 = vld [vmem:[%s166 + $0x568] sm:$0xff]
      %v348 = vld [vmem:[%s166 + $0x570] sm:$0xff]
      %v349 = vld [vmem:[%s166 + $0x578] sm:$0xff]
      %v350 = vld [vmem:[%s166 + $0x580] sm:$0xff]
      %v351 = vld [vmem:[%s166 + $0x588] sm:$0xff]
      %v352 = vld [vmem:[%s166 + $0x590] sm:$0xff]
      %v353 = vld [vmem:[%s166 + $0x598] sm:$0xff]
      %v354 = vld [vmem:[%s166 + $0x5a0] sm:$0xff]
      %v355 = vld [vmem:[%s166 + $0x5a8] sm:$0xff]
      %v356 = vld [vmem:[%s166 + $0x5b0] sm:$0xff]
      %v357 = vld [vmem:[%s166 + $0x5b8] sm:$0xff]
      %v358 = vld [vmem:[%s166 + $0x5c0] sm:$0xff]
      %v359 = vld [vmem:[%s166 + $0x5c8] sm:$0xff]
      %v360 = vld [vmem:[%s166 + $0x5d0] sm:$0xff]
      %v361 = vld [vmem:[%s166 + $0x5d8] sm:$0xff]
      %v362 = vld [vmem:[%s166 + $0x5e0] sm:$0xff]
      %v363 = vld [vmem:[%s166 + $0x5e8] sm:$0xff]
      %v364 = vld [vmem:[%s166 + $0x5f0] sm:$0xff]
      %v365 = vld [vmem:[%s166 + $0x5f8] sm:$0xff]
      %v366 = vld [vmem:[%s166 + $0x600] sm:$0xff]
      %v367 = vld [vmem:[%s166 + $0x608] sm:$0xff]
      %v368 = vld [vmem:[%s166 + $0x610] sm:$0xff]
      %v369 = vld [vmem:[%s166 + $0x618] sm:$0xff]
      %v370 = vld [vmem:[%s166 + $0x620] sm:$0xff]
      %v371 = vld [vmem:[%s166 + $0x628] sm:$0xff]
      %v372 = vld [vmem:[%s166 + $0x630] sm:$0xff]
      %v373 = vld [vmem:[%s166 + $0x638] sm:$0xff]
      %v374 = vld [vmem:[%s166 + $0x640] sm:$0xff]
      %v375 = vld [vmem:[%s166 + $0x648] sm:$0xff]
      %v376 = vld [vmem:[%s166 + $0x650] sm:$0xff]
      %v377 = vld [vmem:[%s166 + $0x658] sm:$0xff]
      %v378 = vld [vmem:[%s166 + $0x660] sm:$0xff]
      %v379 = vld [vmem:[%s166 + $0x668] sm:$0xff]
      %v380 = vld [vmem:[%s166 + $0x670] sm:$0xff]
      %v381 = vld [vmem:[%s166 + $0x678] sm:$0xff]
      %v382 = vld [vmem:[%s166 + $0x680] sm:$0xff]
      %v383 = vld [vmem:[%s166 + $0x688] sm:$0xff]
      %v384 = vld [vmem:[%s166 + $0x690] sm:$0xff]
      %v385 = vld [vmem:[%s166 + $0x698] sm:$0xff]
      %v386 = vld [vmem:[%s166 + $0x6a0] sm:$0xff]
      %v387 = vld [vmem:[%s166 + $0x6a8] sm:$0xff]
      %v388 = vld [vmem:[%s166 + $0x6b0] sm:$0xff]
      %v389 = vld [vmem:[%s166 + $0x6b8] sm:$0xff]
      %v390 = vld [vmem:[%s166 + $0x6c0] sm:$0xff]
      %v391 = vld [vmem:[%s166 + $0x6c8] sm:$0xff]
      %v392 = vld [vmem:[%s166 + $0x6d0] sm:$0xff]
      %v393 = vld [vmem:[%s166 + $0x6d8] sm:$0xff]
      %v394 = vld [vmem:[%s166 + $0x6e0] sm:$0xff]
      %v395 = vld [vmem:[%s166 + $0x6e8] sm:$0xff]
      %v396 = vld [vmem:[%s166 + $0x6f0] sm:$0xff]
      %v397 = vld [vmem:[%s166 + $0x6f8] sm:$0xff]
      %v398 = vld [vmem:[%s166 + $0x700] sm:$0xff]
      %v399 = vld [vmem:[%s166 + $0x708] sm:$0xff]
      %v400 = vld [vmem:[%s166 + $0x710] sm:$0xff]
      %v401 = vld [vmem:[%s166 + $0x718] sm:$0xff]
      %v402 = vld [vmem:[%s166 + $0x720] sm:$0xff]
      %v403 = vld [vmem:[%s166 + $0x728] sm:$0xff]
      %v404 = vld [vmem:[%s166 + $0x730] sm:$0xff]
      %v405 = vld [vmem:[%s166 + $0x738] sm:$0xff]
      %v406 = vld [vmem:[%s166 + $0x740] sm:$0xff]
      %v407 = vld [vmem:[%s166 + $0x748] sm:$0xff]
      %v408 = vld [vmem:[%s166 + $0x750] sm:$0xff]
      %v409 = vld [vmem:[%s166 + $0x758] sm:$0xff]
      %v410 = vld [vmem:[%s166 + $0x760] sm:$0xff]
      %v411 = vld [vmem:[%s166 + $0x768] sm:$0xff]
      %v412 = vld [vmem:[%s166 + $0x770] sm:$0xff]
      %v413 = vld [vmem:[%s166 + $0x778] sm:$0xff]
      %v414 = vld [vmem:[%s166 + $0x780] sm:$0xff]
      %v415 = vld [vmem:[%s166 + $0x788] sm:$0xff]
      %v416 = vld [vmem:[%s166 + $0x790] sm:$0xff]
      %v417 = vld [vmem:[%s166 + $0x798] sm:$0xff]
      %v418 = vld [vmem:[%s166 + $0x7a0] sm:$0xff]
      %v419 = vld [vmem:[%s166 + $0x7a8] sm:$0xff]
      %v420 = vld [vmem:[%s166 + $0x7b0] sm:$0xff]
      %v421 = vld [vmem:[%s166 + $0x7b8] sm:$0xff]
      %v422 = vld [vmem:[%s166 + $0x7c0] sm:$0xff]
      %v423 = vld [vmem:[%s166 + $0x7c8] sm:$0xff]
      %v424 = vld [vmem:[%s166 + $0x7d0] sm:$0xff]
      %v425 = vld [vmem:[%s166 + $0x7d8] sm:$0xff]
      %v426 = vld [vmem:[%s166 + $0x7e0] sm:$0xff]
      %v427 = vld [vmem:[%s166 + $0x7e8] sm:$0xff]
      %v428 = vld [vmem:[%s166 + $0x7f0] sm:$0xff]
      %v429 = vld [vmem:[%s166 + $0x7f8] sm:$0xff]
      %v430 = vld [vmem:[%s1] sm:$0xff]
      %v431 = vld [vmem:[%s1 + $0x8] sm:$0xff]
      %v432 = vld [vmem:[%s1 + $0x10] sm:$0xff]
      %v433 = vld [vmem:[%s1 + $0x18] sm:$0xff]
      %v434 = vld [vmem:[%s2] sm:$0x1]
      %v436 = vlaneseq
      %v437 = vshrl.u32 %v436, 7
      %v438 = vsub.s32 0, %v437
      %v439 = vrot.slane %v434, %v438
      %vm441 = vcmask 261120
      %v443 = vsel %vm441, %v174, 0
      %v446 = vsel %vm441, %v175, 0
      %v449 = vsel %vm441, %v176, 0
      %v452 = vsel %vm441, %v177, 0
      %v455 = vsel %vm441, %v178, 0
      %v458 = vsel %vm441, %v179, 0
      %v461 = vsel %vm441, %v180, 0
      %v464 = vsel %vm441, %v181, 0
      %v467 = vsel %vm441, %v182, 0
      %v470 = vsel %vm441, %v183, 0
      %v473 = vsel %vm441, %v184, 0
      %v476 = vsel %vm441, %v185, 0
      %v479 = vsel %vm441, %v186, 0
      %v482 = vsel %vm441, %v187, 0
      %v485 = vsel %vm441, %v188, 0
      %v488 = vsel %vm441, %v189, 0
      %v491 = vsel %vm441, %v190, 0
      %v494 = vsel %vm441, %v191, 0
      %v497 = vsel %vm441, %v192, 0
      %v500 = vsel %vm441, %v193, 0
      %v503 = vsel %vm441, %v194, 0
      %v506 = vsel %vm441, %v195, 0
      %v509 = vsel %vm441, %v196, 0
      %v512 = vsel %vm441, %v197, 0
      %v515 = vsel %vm441, %v198, 0
      %v518 = vsel %vm441, %v199, 0
      %v521 = vsel %vm441, %v200, 0
      %v524 = vsel %vm441, %v201, 0
      %v527 = vsel %vm441, %v202, 0
      %v530 = vsel %vm441, %v203, 0
      %v533 = vsel %vm441, %v204, 0
      %v536 = vsel %vm441, %v205, 0
      %v539 = vsel %vm441, %v206, 0
      %v542 = vsel %vm441, %v207, 0
      %v545 = vsel %vm441, %v208, 0
      %v548 = vsel %vm441, %v209, 0
      %v551 = vsel %vm441, %v210, 0
      %v554 = vsel %vm441, %v211, 0
      %v557 = vsel %vm441, %v212, 0
      %v560 = vsel %vm441, %v213, 0
      %v563 = vsel %vm441, %v214, 0
      %v566 = vsel %vm441, %v215, 0
      %v569 = vsel %vm441, %v216, 0
      %v572 = vsel %vm441, %v217, 0
      %v575 = vsel %vm441, %v218, 0
      %v578 = vsel %vm441, %v219, 0
      %v581 = vsel %vm441, %v220, 0
      %v584 = vsel %vm441, %v221, 0
      %v587 = vsel %vm441, %v222, 0
      %v590 = vsel %vm441, %v223, 0
      %v593 = vsel %vm441, %v224, 0
      %v596 = vsel %vm441, %v225, 0
      %v599 = vsel %vm441, %v226, 0
      %v602 = vsel %vm441, %v227, 0
      %v605 = vsel %vm441, %v228, 0
      %v608 = vsel %vm441, %v229, 0
      %v611 = vsel %vm441, %v230, 0
      %v614 = vsel %vm441, %v231, 0
      %v617 = vsel %vm441, %v232, 0
      %v620 = vsel %vm441, %v233, 0
      %v623 = vsel %vm441, %v234, 0
      %v626 = vsel %vm441, %v235, 0
      %v629 = vsel %vm441, %v236, 0
      %v632 = vsel %vm441, %v237, 0
      %v635 = vsel %vm441, %v238, 0
      %v638 = vsel %vm441, %v239, 0
      %v641 = vsel %vm441, %v240, 0
      %v644 = vsel %vm441, %v241, 0
      %v647 = vsel %vm441, %v242, 0
      %v650 = vsel %vm441, %v243, 0
      %v653 = vsel %vm441, %v244, 0
      %v656 = vsel %vm441, %v245, 0
      %v659 = vsel %vm441, %v246, 0
      %v662 = vsel %vm441, %v247, 0
      %v665 = vsel %vm441, %v248, 0
      %v668 = vsel %vm441, %v249, 0
      %v671 = vsel %vm441, %v250, 0
      %v674 = vsel %vm441, %v251, 0
      %v677 = vsel %vm441, %v252, 0
      %v680 = vsel %vm441, %v253, 0
      %v683 = vsel %vm441, %v254, 0
      %v686 = vsel %vm441, %v255, 0
      %v689 = vsel %vm441, %v256, 0
      %v692 = vsel %vm441, %v257, 0
      %v695 = vsel %vm441, %v258, 0
      %v698 = vsel %vm441, %v259, 0
      %v701 = vsel %vm441, %v260, 0
      %v704 = vsel %vm441, %v261, 0
      %v707 = vsel %vm441, %v262, 0
      %v710 = vsel %vm441, %v263, 0
      %v713 = vsel %vm441, %v264, 0
      %v716 = vsel %vm441, %v265, 0
      %v719 = vsel %vm441, %v266, 0
      %v722 = vsel %vm441, %v267, 0
      %v725 = vsel %vm441, %v268, 0
      %v728 = vsel %vm441, %v269, 0
      %v731 = vsel %vm441, %v270, 0
      %v734 = vsel %vm441, %v271, 0
      %v737 = vsel %vm441, %v272, 0
      %v740 = vsel %vm441, %v273, 0
      %v743 = vsel %vm441, %v274, 0
      %v746 = vsel %vm441, %v275, 0
      %v749 = vsel %vm441, %v276, 0
      %v752 = vsel %vm441, %v277, 0
      %v755 = vsel %vm441, %v278, 0
      %v758 = vsel %vm441, %v279, 0
      %v761 = vsel %vm441, %v280, 0
      %v764 = vsel %vm441, %v281, 0
      %v767 = vsel %vm441, %v282, 0
      %v770 = vsel %vm441, %v283, 0
      %v773 = vsel %vm441, %v284, 0
      %v776 = vsel %vm441, %v285, 0
      %v779 = vsel %vm441, %v286, 0
      %v782 = vsel %vm441, %v287, 0
      %v785 = vsel %vm441, %v288, 0
      %v788 = vsel %vm441, %v289, 0
      %v791 = vsel %vm441, %v290, 0
      %v794 = vsel %vm441, %v291, 0
      %v797 = vsel %vm441, %v292, 0
      %v800 = vsel %vm441, %v293, 0
      %v803 = vsel %vm441, %v294, 0
      %v806 = vsel %vm441, %v295, 0
      %v809 = vsel %vm441, %v296, 0
      %v812 = vsel %vm441, %v297, 0
      %v815 = vsel %vm441, %v298, 0
      %v818 = vsel %vm441, %v299, 0
      %v821 = vsel %vm441, %v300, 0
      %v824 = vsel %vm441, %v301, 0
      %v827 = vsel %vm441, %v302, 0
      %v830 = vsel %vm441, %v303, 0
      %v833 = vsel %vm441, %v304, 0
      %v836 = vsel %vm441, %v305, 0
      %v839 = vsel %vm441, %v306, 0
      %v842 = vsel %vm441, %v307, 0
      %v845 = vsel %vm441, %v308, 0
      %v848 = vsel %vm441, %v309, 0
      %v851 = vsel %vm441, %v310, 0
      %v854 = vsel %vm441, %v311, 0
      %v857 = vsel %vm441, %v312, 0
      %v860 = vsel %vm441, %v313, 0
      %v863 = vsel %vm441, %v314, 0
      %v866 = vsel %vm441, %v315, 0
      %v869 = vsel %vm441, %v316, 0
      %v872 = vsel %vm441, %v317, 0
      %v875 = vsel %vm441, %v318, 0
      %v878 = vsel %vm441, %v319, 0
      %v881 = vsel %vm441, %v320, 0
      %v884 = vsel %vm441, %v321, 0
      %v887 = vsel %vm441, %v322, 0
      %v890 = vsel %vm441, %v323, 0
      %v893 = vsel %vm441, %v324, 0
      %v896 = vsel %vm441, %v325, 0
      %v899 = vsel %vm441, %v326, 0
      %v902 = vsel %vm441, %v327, 0
      %v905 = vsel %vm441, %v328, 0
      %v908 = vsel %vm441, %v329, 0
      %v911 = vsel %vm441, %v330, 0
      %v914 = vsel %vm441, %v331, 0
      %v917 = vsel %vm441, %v332, 0
      %v920 = vsel %vm441, %v333, 0
      %v923 = vsel %vm441, %v334, 0
      %v926 = vsel %vm441, %v335, 0
      %v929 = vsel %vm441, %v336, 0
      %v932 = vsel %vm441, %v337, 0
      %v935 = vsel %vm441, %v338, 0
      %v938 = vsel %vm441, %v339, 0
      %v941 = vsel %vm441, %v340, 0
      %v944 = vsel %vm441, %v341, 0
      %v947 = vsel %vm441, %v342, 0
      %v950 = vsel %vm441, %v343, 0
      %v953 = vsel %vm441, %v344, 0
      %v956 = vsel %vm441, %v345, 0
      %v959 = vsel %vm441, %v346, 0
      %v962 = vsel %vm441, %v347, 0
      %v965 = vsel %vm441, %v348, 0
      %v968 = vsel %vm441, %v349, 0
      %v971 = vsel %vm441, %v350, 0
      %v974 = vsel %vm441, %v351, 0
      %v977 = vsel %vm441, %v352, 0
      %v980 = vsel %vm441, %v353, 0
      %v983 = vsel %vm441, %v354, 0
      %v986 = vsel %vm441, %v355, 0
      %v989 = vsel %vm441, %v356, 0
      %v992 = vsel %vm441, %v357, 0
      %v995 = vsel %vm441, %v358, 0
      %v998 = vsel %vm441, %v359, 0
      %v1001 = vsel %vm441, %v360, 0
      %v1004 = vsel %vm441, %v361, 0
      %v1007 = vsel %vm441, %v362, 0
      %v1010 = vsel %vm441, %v363, 0
      %v1013 = vsel %vm441, %v364, 0
      %v1016 = vsel %vm441, %v365, 0
      %v1019 = vsel %vm441, %v366, 0
      %v1022 = vsel %vm441, %v367, 0
      %v1025 = vsel %vm441, %v368, 0
      %v1028 = vsel %vm441, %v369, 0
      %v1031 = vsel %vm441, %v370, 0
      %v1034 = vsel %vm441, %v371, 0
      %v1037 = vsel %vm441, %v372, 0
      %v1040 = vsel %vm441, %v373, 0
      %v1043 = vsel %vm441, %v374, 0
      %v1046 = vsel %vm441, %v375, 0
      %v1049 = vsel %vm441, %v376, 0
      %v1052 = vsel %vm441, %v377, 0
      %v1055 = vsel %vm441, %v378, 0
      %v1058 = vsel %vm441, %v379, 0
      %v1061 = vsel %vm441, %v380, 0
      %v1064 = vsel %vm441, %v381, 0
      %v1067 = vsel %vm441, %v382, 0
      %v1070 = vsel %vm441, %v383, 0
      %v1073 = vsel %vm441, %v384, 0
      %v1076 = vsel %vm441, %v385, 0
      %v1079 = vsel %vm441, %v386, 0
      %v1082 = vsel %vm441, %v387, 0
      %v1085 = vsel %vm441, %v388, 0
      %v1088 = vsel %vm441, %v389, 0
      %v1091 = vsel %vm441, %v390, 0
      %v1094 = vsel %vm441, %v391, 0
      %v1097 = vsel %vm441, %v392, 0
      %v1100 = vsel %vm441, %v393, 0
      %v1103 = vsel %vm441, %v394, 0
      %v1106 = vsel %vm441, %v395, 0
      %v1109 = vsel %vm441, %v396, 0
      %v1112 = vsel %vm441, %v397, 0
      %v1115 = vsel %vm441, %v398, 0
      %v1118 = vsel %vm441, %v399, 0
      %v1121 = vsel %vm441, %v400, 0
      %v1124 = vsel %vm441, %v401, 0
      %v1127 = vsel %vm441, %v402, 0
      %v1130 = vsel %vm441, %v403, 0
      %v1133 = vsel %vm441, %v404, 0
      %v1136 = vsel %vm441, %v405, 0
      %v1139 = vsel %vm441, %v406, 0
      %v1142 = vsel %vm441, %v407, 0
      %v1145 = vsel %vm441, %v408, 0
      %v1148 = vsel %vm441, %v409, 0
      %v1151 = vsel %vm441, %v410, 0
      %v1154 = vsel %vm441, %v411, 0
      %v1157 = vsel %vm441, %v412, 0
      %v1160 = vsel %vm441, %v413, 0
      %v1163 = vsel %vm441, %v414, 0
      %v1166 = vsel %vm441, %v415, 0
      %v1169 = vsel %vm441, %v416, 0
      %v1172 = vsel %vm441, %v417, 0
      %v1175 = vsel %vm441, %v418, 0
      %v1178 = vsel %vm441, %v419, 0
      %v1181 = vsel %vm441, %v420, 0
      %v1184 = vsel %vm441, %v421, 0
      %v1187 = vsel %vm441, %v422, 0
      %v1190 = vsel %vm441, %v423, 0
      %v1193 = vsel %vm441, %v424, 0
      %v1196 = vsel %vm441, %v425, 0
      %v1199 = vsel %vm441, %v426, 0
      %v1202 = vsel %vm441, %v427, 0
      %v1205 = vsel %vm441, %v428, 0
      %v1208 = vsel %vm441, %v429, 0
      %1210 = vmatprep.subr.mxu0 0.0
      %1211 = vmatpush1.msra.mxu0 %v430
      %1212 = vmatprep.subr.mxu0 0.0
      %1213 = vmatpush1.msra.mxu0 %v431
      %1214 = vmatprep.subr.mxu0 0.0
      %1215 = vmatpush1.msra.mxu0 %v432
      %1216 = vmatprep.subr.mxu0 0.0
      %1217 = vmatpush1.msra.mxu0 %v433
      %1218 = vmatprep.subr.mxu0 0.0
      %1219 = vmatpush1.msra.mxu0 0.0
      %1220 = vmatprep.subr.mxu0 0.0
      %1221 = vmatpush1.msra.mxu0 0.0
      %1222 = vmatprep.subr.mxu0 0.0
      %1223 = vmatpush1.msra.mxu0 0.0
      %1224 = vmatprep.subr.mxu0 0.0
      %1225 = vmatpush1.msra.mxu0 0.0
      %1226 = vmatprep.subr.mxu0 0.0
      %1227 = vmatpush1.msra.mxu0 0.0
      %1228 = vmatprep.subr.mxu0 0.0
      %1229 = vmatpush1.msra.mxu0 0.0
      %1230 = vmatprep.subr.mxu0 0.0
      %1231 = vmatpush1.msra.mxu0 0.0
      %1232 = vmatprep.subr.mxu0 0.0
      %1233 = vmatpush1.msra.mxu0 0.0
      %1234 = vmatprep.subr.mxu0 0.0
      %1235 = vmatpush1.msra.mxu0 0.0
      %1236 = vmatprep.subr.mxu0 0.0
      %1237 = vmatpush1.msra.mxu0 0.0
      %1238 = vmatprep.subr.mxu0 0.0
      %1239 = vmatpush1.msra.mxu0 0.0
      %1240 = vmatprep.subr.mxu0 0.0
      %1241 = vmatpush1.msra.mxu0 0.0
      %1242 = vmatprep.subr.mxu0 0.0
      %1243 = vmatpush1.msra.mxu0 0.0
      %1244 = vmatprep.subr.mxu0 0.0
      %1245 = vmatpush1.msra.mxu0 0.0
      %1246 = vmatprep.subr.mxu0 0.0
      %1247 = vmatpush1.msra.mxu0 0.0
      %1248 = vmatprep.subr.mxu0 0.0
      %1249 = vmatpush1.msra.mxu0 0.0
      %1250 = vmatprep.subr.mxu0 0.0
      %1251 = vmatpush1.msra.mxu0 0.0
      %1252 = vmatprep.subr.mxu0 0.0
      %1253 = vmatpush1.msra.mxu0 0.0
      %1254 = vmatprep.subr.mxu0 0.0
      %1255 = vmatpush1.msra.mxu0 0.0
      %1256 = vmatprep.subr.mxu0 0.0
      %1257 = vmatpush1.msra.mxu0 0.0
      %1258 = vmatprep.subr.mxu0 0.0
      %1259 = vmatpush1.msra.mxu0 0.0
      %1260 = vmatprep.subr.mxu0 0.0
      %1261 = vmatpush1.msra.mxu0 0.0
      %1262 = vmatprep.subr.mxu0 0.0
      %1263 = vmatpush1.msra.mxu0 0.0
      %1264 = vmatprep.subr.mxu0 0.0
      %1265 = vmatpush1.msra.mxu0 0.0
      %1266 = vmatprep.subr.mxu0 0.0
      %1267 = vmatpush1.msra.mxu0 0.0
      %1268 = vmatprep.subr.mxu0 0.0
      %1269 = vmatpush1.msra.mxu0 0.0
      %1270 = vmatprep.subr.mxu0 0.0
      %1271 = vmatpush1.msra.mxu0 0.0
      %1272 = vmatprep.subr.mxu0 0.0
      %1273 = vmatpush1.msra.mxu0 0.0
      %1274 = vmatprep.mubr.f32.mxu0 0.0
      %1275 = vmatmul.mubr.f32.gmra.mrb[0].mxu0 %v443
      %v1276 = vpop.f32.mrb[0].mxu0
      %v1277 = vadd.f32 %v439, %v1276
      %v1278 = vpop.f32.mrb[0].mxu0
      %1279 = vmatprep.mubr.f32.mxu0 0.0
      %1280 = vmatmul.mubr.f32.gmra.mrb[0].mxu0 %v446
      %v1281 = vpop.f32.mrb[0].mxu0
      %v1282 = vadd.f32 %v439, %v1281
      %v1283 = vpop.f32.mrb[0].mxu0
      %1284 = vmatprep.mubr.f32.mxu0 0.0
      %1285 = vmatmul.mubr.f32.gmra.mrb[0].mxu0 %v449
      %v1286 = vpop.f32.mrb[0].mxu0
      %v1287 = vadd.f32 %v439, %v1286
      %v1288 = vpop.f32.mrb[0].mxu0
      %1289 = vmatprep.mubr.f32.mxu0 0.0
      %1290 = vmatmul.mubr.f32.gmra.mrb[0].mxu0 %v452
      %v1291 = vpop.f32.mrb[0].mxu0
      %v1292 = vadd.f32 %v439, %v1291
      %v1293 = vpop.f32.mrb[0].mxu0
      %1294 = vmatprep.mubr.f32.mxu0 0.0
      %1295 = vmatmul.mubr.f32.gmra.mrb[0].mxu0 %v455
      %v1296 = vpop.f32.mrb[0].mxu0
      %v1297 = vadd.f32 %v439, %v1296
      %v1298 = vpop.f32.mrb[0].mxu0
      %1299 = vmatprep.mubr.f32.mxu0 0.0
      %1300 = vmatmul.mubr.f32.gmra.mrb[0].mxu0 %v458
      %v1301 = vpop.f32.mrb[0].mxu0
      %v1302 = vadd.f32 %v439, %v1301
      %v1303 = vpop.f32.mrb[0].mxu0
      %1304 = vmatprep.mubr.f32.mxu0 0.0
      %1305 = vmatmul.mubr.f32.gmra.mrb[0].mxu0 %v461
      %v1306 = vpop.f32.mrb[0].mxu0
      %v1307 = vadd.f32 %v439, %v1306
      %v1308 = vpop.f32.mrb[0].mxu0
      %1309 = vmatprep.mubr.f32.mxu0 0.0
      %1310 = vmatmul.mubr.f32.gmra.mrb[0].mxu0 %v464
      %v1311 = vpop.f32.mrb[0].mxu0
      %v1312 = vadd.f32 %v439, %v1311
      %v1313 = vpop.f32.mrb[0].mxu0
      %1314 = vmatprep.mubr.f32.mxu0 0.0
      %1315 = vmatmul.mubr.f32.gmra.mrb[0].mxu0 %v467
      %v1316 = vpop.f32.mrb[0].mxu0
      %v1317 = vadd.f32 %v439, %v1316
      %v1318 = vpop.f32.mrb[0].mxu0
      %1319 = vmatprep.mubr.f32.mxu0 0.0
      %1320 = vmatmul.mubr.f32.gmra.mrb[0].mxu0 %v470
      %v1321 = vpop.f32.mrb[0].mxu0
      %v1322 = vadd.f32 %v439, %v1321
      %v1323 = vpop.f32.mrb[0].mxu0
      %1324 = vmatprep.mubr.f32.mxu0 0.0
      %1325 = vmatmul.mubr.f32.gmra.mrb[0].mxu0 %v473
      %v1326 = vpop.f32.mrb[0].mxu0
      %v1327 = vadd.f32 %v439, %v1326
      %v1328 = vpop.f32.mrb[0].mxu0
      %1329 = vmatprep.mubr.f32.mxu0 0.0
      %1330 = vmatmul.mubr.f32.gmra.mrb[0].mxu0 %v476
      %v1331 = vpop.f32.mrb[0].mxu0
      %v1332 = vadd.f32 %v439, %v1331
      %v1333 = vpop.f32.mrb[0].mxu0
      %1334 = vmatprep.mubr.f32.mxu0 0.0
      %1335 = vmatmul.mubr.f32.gmra.mrb[0].mxu0 %v479
      %v1336 = vpop.f32.mrb[0].mxu0
      %v1337 = vadd.f32 %v439, %v1336
      %v1338 = vpop.f32.mrb[0].mxu0
      %1339 = vmatprep.mubr.f32.mxu0 0.0
      %1340 = vmatmul.mubr.f32.gmra.mrb[0].mxu0 %v482
      %v1341 = vpop.f32.mrb[0].mxu0
      %v1342 = vadd.f32 %v439, %v1341
      %v1343 = vpop.f32.mrb[0].mxu0
      %1344 = vmatprep.mubr.f32.mxu0 0.0
      %1345 = vmatmul.mubr.f32.gmra.mrb[0].mxu0 %v485
      %v1346 = vpop.f32.mrb[0].mxu0
      %v1347 = vadd.f32 %v439, %v1346
      %v1348 = vpop.f32.mrb[0].mxu0
      %1349 = vmatprep.mubr.f32.mxu0 0.0
      %1350 = vmatmul.mubr.f32.gmra.mrb[0].mxu0 %v488
      %v1351 = vpop.f32.mrb[0].mxu0
      %v1352 = vadd.f32 %v439, %v1351
      %v1353 = vpop.f32.mrb[0].mxu0
      %1354 = vmatprep.mubr.f32.mxu0 0.0
      %1355 = vmatmul.mubr.f32.gmra.mrb[0].mxu0 %v491
      %v1356 = vpop.f32.mrb[0].mxu0
      %v1357 = vadd.f32 %v439, %v1356
      %v1358 = vpop.f32.mrb[0].mxu0
      %1359 = vmatprep.mubr.f32.mxu0 0.0
      %1360 = vmatmul.mubr.f32.gmra.mrb[0].mxu0 %v494
      %v1361 = vpop.f32.mrb[0].mxu0
      %v1362 = vadd.f32 %v439, %v1361
      %v1363 = vpop.f32.mrb[0].mxu0
      %1364 = vmatprep.mubr.f32.mxu0 0.0
      %1365 = vmatmul.mubr.f32.gmra.mrb[0].mxu0 %v497
      %v1366 = vpop.f32.mrb[0].mxu0
      %v1367 = vadd.f32 %v439, %v1366
      %v1368 = vpop.f32.mrb[0].mxu0
      %1369 = vmatprep.mubr.f32.mxu0 0.0
      %1370 = vmatmul.mubr.f32.gmra.mrb[0].mxu0 %v500
      %v1371 = vpop.f32.mrb[0].mxu0
      %v1372 = vadd.f32 %v439, %v1371
      %v1373 = vpop.f32.mrb[0].mxu0
      %1374 = vmatprep.mubr.f32.mxu0 0.0
      %1375 = vmatmul.mubr.f32.gmra.mrb[0].mxu0 %v503
      %v1376 = vpop.f32.mrb[0].mxu0
      %v1377 = vadd.f32 %v439, %v1376
      %v1378 = vpop.f32.mrb[0].mxu0
      %1379 = vmatprep.mubr.f32.mxu0 0.0
      %1380 = vmatmul.mubr.f32.gmra.mrb[0].mxu0 %v506
      %v1381 = vpop.f32.mrb[0].mxu0
      %v1382 = vadd.f32 %v439, %v1381
      %v1383 = vpop.f32.mrb[0].mxu0
      %1384 = vmatprep.mubr.f32.mxu0 0.0
      %1385 = vmatmul.mubr.f32.gmra.mrb[0].mxu0 %v509
      %v1386 = vpop.f32.mrb[0].mxu0
      %v1387 = vadd.f32 %v439, %v1386
      %v1388 = vpop.f32.mrb[0].mxu0
      %1389 = vmatprep.mubr.f32.mxu0 0.0
      %1390 = vmatmul.mubr.f32.gmra.mrb[0].mxu0 %v512
      %v1391 = vpop.f32.mrb[0].mxu0
      %v1392 = vadd.f32 %v439, %v1391
      %v1393 = vpop.f32.mrb[0].mxu0
      %1394 = vmatprep.mubr.f32.mxu0 0.0
      %1395 = vmatmul.mubr.f32.gmra.mrb[0].mxu0 %v515
      %v1396 = vpop.f32.mrb[0].mxu0
      %v1397 = vadd.f32 %v439, %v1396
      %v1398 = vpop.f32.mrb[0].mxu0
      %1399 = vmatprep.mubr.f32.mxu0 0.0
      %1400 = vmatmul.mubr.f32.gmra.mrb[0].mxu0 %v518
      %v1401 = vpop.f32.mrb[0].mxu0
      %v1402 = vadd.f32 %v439, %v1401
      %v1403 = vpop.f32.mrb[0].mxu0
      %1404 = vmatprep.mubr.f32.mxu0 0.0
      %1405 = vmatmul.mubr.f32.gmra.mrb[0].mxu0 %v521
      %v1406 = vpop.f32.mrb[0].mxu0
      %v1407 = vadd.f32 %v439, %v1406
      %v1408 = vpop.f32.mrb[0].mxu0
      %1409 = vmatprep.mubr.f32.mxu0 0.0
      %1410 = vmatmul.mubr.f32.gmra.mrb[0].mxu0 %v524
      %v1411 = vpop.f32.mrb[0].mxu0
      %v1412 = vadd.f32 %v439, %v1411
      %v1413 = vpop.f32.mrb[0].mxu0
      %1414 = vmatprep.mubr.f32.mxu0 0.0
      %1415 = vmatmul.mubr.f32.gmra.mrb[0].mxu0 %v527
      %v1416 = vpop.f32.mrb[0].mxu0
      %v1417 = vadd.f32 %v439, %v1416
      %v1418 = vpop.f32.mrb[0].mxu0
      %1419 = vmatprep.mubr.f32.mxu0 0.0
      %1420 = vmatmul.mubr.f32.gmra.mrb[0].mxu0 %v530
      %v1421 = vpop.f32.mrb[0].mxu0
      %v1422 = vadd.f32 %v439, %v1421
      %v1423 = vpop.f32.mrb[0].mxu0
      %1424 = vmatprep.mubr.f32.mxu0 0.0
      %1425 = vmatmul.mubr.f32.gmra.mrb[0].mxu0 %v533
      %v1426 = vpop.f32.mrb[0].mxu0
      %v1427 = vadd.f32 %v439, %v1426
      %v1428 = vpop.f32.mrb[0].mxu0
      %1429 = vmatprep.mubr.f32.mxu0 0.0
      %1430 = vmatmul.mubr.f32.gmra.mrb[0].mxu0 %v536
      %v1431 = vpop.f32.mrb[0].mxu0
      %v1432 = vadd.f32 %v439, %v1431
      %v1433 = vpop.f32.mrb[0].mxu0
      %1434 = vmatprep.mubr.f32.mxu0 0.0
      %1435 = vmatmul.mubr.f32.gmra.mrb[0].mxu0 %v539
      %v1436 = vpop.f32.mrb[0].mxu0
      %v1437 = vadd.f32 %v439, %v1436
      %v1438 = vpop.f32.mrb[0].mxu0
      %1439 = vmatprep.mubr.f32.mxu0 0.0
      %1440 = vmatmul.mubr.f32.gmra.mrb[0].mxu0 %v542
      %v1441 = vpop.f32.mrb[0].mxu0
      %v1442 = vadd.f32 %v439, %v1441
      %v1443 = vpop.f32.mrb[0].mxu0
      %1444 = vmatprep.mubr.f32.mxu0 0.0
      %1445 = vmatmul.mubr.f32.gmra.mrb[0].mxu0 %v545
      %v1446 = vpop.f32.mrb[0].mxu0
      %v1447 = vadd.f32 %v439, %v1446
      %v1448 = vpop.f32.mrb[0].mxu0
      %1449 = vmatprep.mubr.f32.mxu0 0.0
      %1450 = vmatmul.mubr.f32.gmra.mrb[0].mxu0 %v548
      %v1451 = vpop.f32.mrb[0].mxu0
      %v1452 = vadd.f32 %v439, %v1451
      %v1453 = vpop.f32.mrb[0].mxu0
      %1454 = vmatprep.mubr.f32.mxu0 0.0
      %1455 = vmatmul.mubr.f32.gmra.mrb[0].mxu0 %v551
      %v1456 = vpop.f32.mrb[0].mxu0
      %v1457 = vadd.f32 %v439, %v1456
      %v1458 = vpop.f32.mrb[0].mxu0
      %1459 = vmatprep.mubr.f32.mxu0 0.0
      %1460 = vmatmul.mubr.f32.gmra.mrb[0].mxu0 %v554
      %v1461 = vpop.f32.mrb[0].mxu0
      %v1462 = vadd.f32 %v439, %v1461
      %v1463 = vpop.f32.mrb[0].mxu0
      %1464 = vmatprep.mubr.f32.mxu0 0.0
      %1465 = vmatmul.mubr.f32.gmra.mrb[0].mxu0 %v557
      %v1466 = vpop.f32.mrb[0].mxu0
      %v1467 = vadd.f32 %v439, %v1466
      %v1468 = vpop.f32.mrb[0].mxu0
      %1469 = vmatprep.mubr.f32.mxu0 0.0
      %1470 = vmatmul.mubr.f32.gmra.mrb[0].mxu0 %v560
      %v1471 = vpop.f32.mrb[0].mxu0
      %v1472 = vadd.f32 %v439, %v1471
      %v1473 = vpop.f32.mrb[0].mxu0
      %1474 = vmatprep.mubr.f32.mxu0 0.0
      %1475 = vmatmul.mubr.f32.gmra.mrb[0].mxu0 %v563
      %v1476 = vpop.f32.mrb[0].mxu0
      %v1477 = vadd.f32 %v439, %v1476
      %v1478 = vpop.f32.mrb[0].mxu0
      %1479 = vmatprep.mubr.f32.mxu0 0.0
      %1480 = vmatmul.mubr.f32.gmra.mrb[0].mxu0 %v566
      %v1481 = vpop.f32.mrb[0].mxu0
      %v1482 = vadd.f32 %v439, %v1481
      %v1483 = vpop.f32.mrb[0].mxu0
      %1484 = vmatprep.mubr.f32.mxu0 0.0
      %1485 = vmatmul.mubr.f32.gmra.mrb[0].mxu0 %v569
      %v1486 = vpop.f32.mrb[0].mxu0
      %v1487 = vadd.f32 %v439, %v1486
      %v1488 = vpop.f32.mrb[0].mxu0
      %1489 = vmatprep.mubr.f32.mxu0 0.0
      %1490 = vmatmul.mubr.f32.gmra.mrb[0].mxu0 %v572
      %v1491 = vpop.f32.mrb[0].mxu0
      %v1492 = vadd.f32 %v439, %v1491
      %v1493 = vpop.f32.mrb[0].mxu0
      %1494 = vmatprep.mubr.f32.mxu0 0.0
      %1495 = vmatmul.mubr.f32.gmra.mrb[0].mxu0 %v575
      %v1496 = vpop.f32.mrb[0].mxu0
      %v1497 = vadd.f32 %v439, %v1496
      %v1498 = vpop.f32.mrb[0].mxu0
      %1499 = vmatprep.mubr.f32.mxu0 0.0
      %1500 = vmatmul.mubr.f32.gmra.mrb[0].mxu0 %v578
      %v1501 = vpop.f32.mrb[0].mxu0
      %v1502 = vadd.f32 %v439, %v1501
      %v1503 = vpop.f32.mrb[0].mxu0
      %1504 = vmatprep.mubr.f32.mxu0 0.0
      %1505 = vmatmul.mubr.f32.gmra.mrb[0].mxu0 %v581
      %v1506 = vpop.f32.mrb[0].mxu0
      %v1507 = vadd.f32 %v439, %v1506
      %v1508 = vpop.f32.mrb[0].mxu0
      %1509 = vmatprep.mubr.f32.mxu0 0.0
      %1510 = vmatmul.mubr.f32.gmra.mrb[0].mxu0 %v584
      %v1511 = vpop.f32.mrb[0].mxu0
      %v1512 = vadd.f32 %v439, %v1511
      %v1513 = vpop.f32.mrb[0].mxu0
      %1514 = vmatprep.mubr.f32.mxu0 0.0
      %1515 = vmatmul.mubr.f32.gmra.mrb[0].mxu0 %v587
      %v1516 = vpop.f32.mrb[0].mxu0
      %v1517 = vadd.f32 %v439, %v1516
      %v1518 = vpop.f32.mrb[0].mxu0
      %1519 = vmatprep.mubr.f32.mxu0 0.0
      %1520 = vmatmul.mubr.f32.gmra.mrb[0].mxu0 %v590
      %v1521 = vpop.f32.mrb[0].mxu0
      %v1522 = vadd.f32 %v439, %v1521
      %v1523 = vpop.f32.mrb[0].mxu0
      %1524 = vmatprep.mubr.f32.mxu0 0.0
      %1525 = vmatmul.mubr.f32.gmra.mrb[0].mxu0 %v593
      %v1526 = vpop.f32.mrb[0].mxu0
      %v1527 = vadd.f32 %v439, %v1526
      %v1528 = vpop.f32.mrb[0].mxu0
      %1529 = vmatprep.mubr.f32.mxu0 0.0
      %1530 = vmatmul.mubr.f32.gmra.mrb[0].mxu0 %v596
      %v1531 = vpop.f32.mrb[0].mxu0
      %v1532 = vadd.f32 %v439, %v1531
      %v1533 = vpop.f32.mrb[0].mxu0
      %1534 = vmatprep.mubr.f32.mxu0 0.0
      %1535 = vmatmul.mubr.f32.gmra.mrb[0].mxu0 %v599
      %v1536 = vpop.f32.mrb[0].mxu0
      %v1537 = vadd.f32 %v439, %v1536
      %v1538 = vpop.f32.mrb[0].mxu0
      %1539 = vmatprep.mubr.f32.mxu0 0.0
      %1540 = vmatmul.mubr.f32.gmra.mrb[0].mxu0 %v602
      %v1541 = vpop.f32.mrb[0].mxu0
      %v1542 = vadd.f32 %v439, %v1541
      %v1543 = vpop.f32.mrb[0].mxu0
      %1544 = vmatprep.mubr.f32.mxu0 0.0
      %1545 = vmatmul.mubr.f32.gmra.mrb[0].mxu0 %v605
      %v1546 = vpop.f32.mrb[0].mxu0
      %v1547 = vadd.f32 %v439, %v1546
      %v1548 = vpop.f32.mrb[0].mxu0
      %1549 = vmatprep.mubr.f32.mxu0 0.0
      %1550 = vmatmul.mubr.f32.gmra.mrb[0].mxu0 %v608
      %v1551 = vpop.f32.mrb[0].mxu0
      %v1552 = vadd.f32 %v439, %v1551
      %v1553 = vpop.f32.mrb[0].mxu0
      %1554 = vmatprep.mubr.f32.mxu0 0.0
      %1555 = vmatmul.mubr.f32.gmra.mrb[0].mxu0 %v611
      %v1556 = vpop.f32.mrb[0].mxu0
      %v1557 = vadd.f32 %v439, %v1556
      %v1558 = vpop.f32.mrb[0].mxu0
      %1559 = vmatprep.mubr.f32.mxu0 0.0
      %1560 = vmatmul.mubr.f32.gmra.mrb[0].mxu0 %v614
      %v1561 = vpop.f32.mrb[0].mxu0
      %v1562 = vadd.f32 %v439, %v1561
      %v1563 = vpop.f32.mrb[0].mxu0
      %1564 = vmatprep.mubr.f32.mxu0 0.0
      %1565 = vmatmul.mubr.f32.gmra.mrb[0].mxu0 %v617
      %v1566 = vpop.f32.mrb[0].mxu0
      %v1567 = vadd.f32 %v439, %v1566
      %v1568 = vpop.f32.mrb[0].mxu0
      %1569 = vmatprep.mubr.f32.mxu0 0.0
      %1570 = vmatmul.mubr.f32.gmra.mrb[0].mxu0 %v620
      %v1571 = vpop.f32.mrb[0].mxu0
      %v1572 = vadd.f32 %v439, %v1571
      %v1573 = vpop.f32.mrb[0].mxu0
      %1574 = vmatprep.mubr.f32.mxu0 0.0
      %1575 = vmatmul.mubr.f32.gmra.mrb[0].mxu0 %v623
      %v1576 = vpop.f32.mrb[0].mxu0
      %v1577 = vadd.f32 %v439, %v1576
      %v1578 = vpop.f32.mrb[0].mxu0
      %1579 = vmatprep.mubr.f32.mxu0 0.0
      %1580 = vmatmul.mubr.f32.gmra.mrb[0].mxu0 %v626
      %v1581 = vpop.f32.mrb[0].mxu0
      %v1582 = vadd.f32 %v439, %v1581
      %v1583 = vpop.f32.mrb[0].mxu0
      %1584 = vmatprep.mubr.f32.mxu0 0.0
      %1585 = vmatmul.mubr.f32.gmra.mrb[0].mxu0 %v629
      %v1586 = vpop.f32.mrb[0].mxu0
      %v1587 = vadd.f32 %v439, %v1586
      %v1588 = vpop.f32.mrb[0].mxu0
      %1589 = vmatprep.mubr.f32.mxu0 0.0
      %1590 = vmatmul.mubr.f32.gmra.mrb[0].mxu0 %v632
      %v1591 = vpop.f32.mrb[0].mxu0
      %v1592 = vadd.f32 %v439, %v1591
      %v1593 = vpop.f32.mrb[0].mxu0
      %1594 = vmatprep.mubr.f32.mxu0 0.0
      %1595 = vmatmul.mubr.f32.gmra.mrb[0].mxu0 %v635
      %v1596 = vpop.f32.mrb[0].mxu0
      %v1597 = vadd.f32 %v439, %v1596
      %v1598 = vpop.f32.mrb[0].mxu0
      %1599 = vmatprep.mubr.f32.mxu0 0.0
      %1600 = vmatmul.mubr.f32.gmra.mrb[0].mxu0 %v638
      %v1601 = vpop.f32.mrb[0].mxu0
      %v1602 = vadd.f32 %v439, %v1601
      %v1603 = vpop.f32.mrb[0].mxu0
      %1604 = vmatprep.mubr.f32.mxu0 0.0
      %1605 = vmatmul.mubr.f32.gmra.mrb[0].mxu0 %v641
      %v1606 = vpop.f32.mrb[0].mxu0
      %v1607 = vadd.f32 %v439, %v1606
      %v1608 = vpop.f32.mrb[0].mxu0
      %1609 = vmatprep.mubr.f32.mxu0 0.0
      %1610 = vmatmul.mubr.f32.gmra.mrb[0].mxu0 %v644
      %v1611 = vpop.f32.mrb[0].mxu0
      %v1612 = vadd.f32 %v439, %v1611
      %v1613 = vpop.f32.mrb[0].mxu0
      %1614 = vmatprep.mubr.f32.mxu0 0.0
      %1615 = vmatmul.mubr.f32.gmra.mrb[0].mxu0 %v647
      %v1616 = vpop.f32.mrb[0].mxu0
      %v1617 = vadd.f32 %v439, %v1616
      %v1618 = vpop.f32.mrb[0].mxu0
      %1619 = vmatprep.mubr.f32.mxu0 0.0
      %1620 = vmatmul.mubr.f32.gmra.mrb[0].mxu0 %v650
      %v1621 = vpop.f32.mrb[0].mxu0
      %v1622 = vadd.f32 %v439, %v1621
      %v1623 = vpop.f32.mrb[0].mxu0
      %1624 = vmatprep.mubr.f32.mxu0 0.0
      %1625 = vmatmul.mubr.f32.gmra.mrb[0].mxu0 %v653
      %v1626 = vpop.f32.mrb[0].mxu0
      %v1627 = vadd.f32 %v439, %v1626
      %v1628 = vpop.f32.mrb[0].mxu0
      %1629 = vmatprep.mubr.f32.mxu0 0.0
      %1630 = vmatmul.mubr.f32.gmra.mrb[0].mxu0 %v656
      %v1631 = vpop.f32.mrb[0].mxu0
      %v1632 = vadd.f32 %v439, %v1631
      %v1633 = vpop.f32.mrb[0].mxu0
      %1634 = vmatprep.mubr.f32.mxu0 0.0
      %1635 = vmatmul.mubr.f32.gmra.mrb[0].mxu0 %v659
      %v1636 = vpop.f32.mrb[0].mxu0
      %v1637 = vadd.f32 %v439, %v1636
      %v1638 = vpop.f32.mrb[0].mxu0
      %1639 = vmatprep.mubr.f32.mxu0 0.0
      %1640 = vmatmul.mubr.f32.gmra.mrb[0].mxu0 %v662
      %v1641 = vpop.f32.mrb[0].mxu0
      %v1642 = vadd.f32 %v439, %v1641
      %v1643 = vpop.f32.mrb[0].mxu0
      %1644 = vmatprep.mubr.f32.mxu0 0.0
      %1645 = vmatmul.mubr.f32.gmra.mrb[0].mxu0 %v665
      %v1646 = vpop.f32.mrb[0].mxu0
      %v1647 = vadd.f32 %v439, %v1646
      %v1648 = vpop.f32.mrb[0].mxu0
      %1649 = vmatprep.mubr.f32.mxu0 0.0
      %1650 = vmatmul.mubr.f32.gmra.mrb[0].mxu0 %v668
      %v1651 = vpop.f32.mrb[0].mxu0
      %v1652 = vadd.f32 %v439, %v1651
      %v1653 = vpop.f32.mrb[0].mxu0
      %1654 = vmatprep.mubr.f32.mxu0 0.0
      %1655 = vmatmul.mubr.f32.gmra.mrb[0].mxu0 %v671
      %v1656 = vpop.f32.mrb[0].mxu0
      %v1657 = vadd.f32 %v439, %v1656
      %v1658 = vpop.f32.mrb[0].mxu0
      %1659 = vmatprep.mubr.f32.mxu0 0.0
      %1660 = vmatmul.mubr.f32.gmra.mrb[0].mxu0 %v674
      %v1661 = vpop.f32.mrb[0].mxu0
      %v1662 = vadd.f32 %v439, %v1661
      %v1663 = vpop.f32.mrb[0].mxu0
      %1664 = vmatprep.mubr.f32.mxu0 0.0
      %1665 = vmatmul.mubr.f32.gmra.mrb[0].mxu0 %v677
      %v1666 = vpop.f32.mrb[0].mxu0
      %v1667 = vadd.f32 %v439, %v1666
      %v1668 = vpop.f32.mrb[0].mxu0
      %1669 = vmatprep.mubr.f32.mxu0 0.0
      %1670 = vmatmul.mubr.f32.gmra.mrb[0].mxu0 %v680
      %v1671 = vpop.f32.mrb[0].mxu0
      %v1672 = vadd.f32 %v439, %v1671
      %v1673 = vpop.f32.mrb[0].mxu0
      %1674 = vmatprep.mubr.f32.mxu0 0.0
      %1675 = vmatmul.mubr.f32.gmra.mrb[0].mxu0 %v683
      %v1676 = vpop.f32.mrb[0].mxu0
      %v1677 = vadd.f32 %v439, %v1676
      %v1678 = vpop.f32.mrb[0].mxu0
      %1679 = vmatprep.mubr.f32.mxu0 0.0
      %1680 = vmatmul.mubr.f32.gmra.mrb[0].mxu0 %v686
      %v1681 = vpop.f32.mrb[0].mxu0
      %v1682 = vadd.f32 %v439, %v1681
      %v1683 = vpop.f32.mrb[0].mxu0
      %1684 = vmatprep.mubr.f32.mxu0 0.0
      %1685 = vmatmul.mubr.f32.gmra.mrb[0].mxu0 %v689
      %v1686 = vpop.f32.mrb[0].mxu0
      %v1687 = vadd.f32 %v439, %v1686
      %v1688 = vpop.f32.mrb[0].mxu0
      %1689 = vmatprep.mubr.f32.mxu0 0.0
      %1690 = vmatmul.mubr.f32.gmra.mrb[0].mxu0 %v692
      %v1691 = vpop.f32.mrb[0].mxu0
      %v1692 = vadd.f32 %v439, %v1691
      %v1693 = vpop.f32.mrb[0].mxu0
      %1694 = vmatprep.mubr.f32.mxu0 0.0
      %1695 = vmatmul.mubr.f32.gmra.mrb[0].mxu0 %v695
      %v1696 = vpop.f32.mrb[0].mxu0
      %v1697 = vadd.f32 %v439, %v1696
      %v1698 = vpop.f32.mrb[0].mxu0
      %1699 = vmatprep.mubr.f32.mxu0 0.0
      %1700 = vmatmul.mubr.f32.gmra.mrb[0].mxu0 %v698
      %v1701 = vpop.f32.mrb[0].mxu0
      %v1702 = vadd.f32 %v439, %v1701
      %v1703 = vpop.f32.mrb[0].mxu0
      %1704 = vmatprep.mubr.f32.mxu0 0.0
      %1705 = vmatmul.mubr.f32.gmra.mrb[0].mxu0 %v701
      %v1706 = vpop.f32.mrb[0].mxu0
      %v1707 = vadd.f32 %v439, %v1706
      %v1708 = vpop.f32.mrb[0].mxu0
      %1709 = vmatprep.mubr.f32.mxu0 0.0
      %1710 = vmatmul.mubr.f32.gmra.mrb[0].mxu0 %v704
      %v1711 = vpop.f32.mrb[0].mxu0
      %v1712 = vadd.f32 %v439, %v1711
      %v1713 = vpop.f32.mrb[0].mxu0
      %1714 = vmatprep.mubr.f32.mxu0 0.0
      %1715 = vmatmul.mubr.f32.gmra.mrb[0].mxu0 %v707
      %v1716 = vpop.f32.mrb[0].mxu0
      %v1717 = vadd.f32 %v439, %v1716
      %v1718 = vpop.f32.mrb[0].mxu0
      %1719 = vmatprep.mubr.f32.mxu0 0.0
      %1720 = vmatmul.mubr.f32.gmra.mrb[0].mxu0 %v710
      %v1721 = vpop.f32.mrb[0].mxu0
      %v1722 = vadd.f32 %v439, %v1721
      %v1723 = vpop.f32.mrb[0].mxu0
      %1724 = vmatprep.mubr.f32.mxu0 0.0
      %1725 = vmatmul.mubr.f32.gmra.mrb[0].mxu0 %v713
      %v1726 = vpop.f32.mrb[0].mxu0
      %v1727 = vadd.f32 %v439, %v1726
      %v1728 = vpop.f32.mrb[0].mxu0
      %1729 = vmatprep.mubr.f32.mxu0 0.0
      %1730 = vmatmul.mubr.f32.gmra.mrb[0].mxu0 %v716
      %v1731 = vpop.f32.mrb[0].mxu0
      %v1732 = vadd.f32 %v439, %v1731
      %v1733 = vpop.f32.mrb[0].mxu0
      %1734 = vmatprep.mubr.f32.mxu0 0.0
      %1735 = vmatmul.mubr.f32.gmra.mrb[0].mxu0 %v719
      %v1736 = vpop.f32.mrb[0].mxu0
      %v1737 = vadd.f32 %v439, %v1736
      %v1738 = vpop.f32.mrb[0].mxu0
      %1739 = vmatprep.mubr.f32.mxu0 0.0
      %1740 = vmatmul.mubr.f32.gmra.mrb[0].mxu0 %v722
      %v1741 = vpop.f32.mrb[0].mxu0
      %v1742 = vadd.f32 %v439, %v1741
      %v1743 = vpop.f32.mrb[0].mxu0
      %1744 = vmatprep.mubr.f32.mxu0 0.0
      %1745 = vmatmul.mubr.f32.gmra.mrb[0].mxu0 %v725
      %v1746 = vpop.f32.mrb[0].mxu0
      %v1747 = vadd.f32 %v439, %v1746
      %v1748 = vpop.f32.mrb[0].mxu0
      %1749 = vmatprep.mubr.f32.mxu0 0.0
      %1750 = vmatmul.mubr.f32.gmra.mrb[0].mxu0 %v728
      %v1751 = vpop.f32.mrb[0].mxu0
      %v1752 = vadd.f32 %v439, %v1751
      %v1753 = vpop.f32.mrb[0].mxu0
      %1754 = vmatprep.mubr.f32.mxu0 0.0
      %1755 = vmatmul.mubr.f32.gmra.mrb[0].mxu0 %v731
      %v1756 = vpop.f32.mrb[0].mxu0
      %v1757 = vadd.f32 %v439, %v1756
      %v1758 = vpop.f32.mrb[0].mxu0
      %1759 = vmatprep.mubr.f32.mxu0 0.0
      %1760 = vmatmul.mubr.f32.gmra.mrb[0].mxu0 %v734
      %v1761 = vpop.f32.mrb[0].mxu0
      %v1762 = vadd.f32 %v439, %v1761
      %v1763 = vpop.f32.mrb[0].mxu0
      %1764 = vmatprep.mubr.f32.mxu0 0.0
      %1765 = vmatmul.mubr.f32.gmra.mrb[0].mxu0 %v737
      %v1766 = vpop.f32.mrb[0].mxu0
      %v1767 = vadd.f32 %v439, %v1766
      %v1768 = vpop.f32.mrb[0].mxu0
      %1769 = vmatprep.mubr.f32.mxu0 0.0
      %1770 = vmatmul.mubr.f32.gmra.mrb[0].mxu0 %v740
      %v1771 = vpop.f32.mrb[0].mxu0
      %v1772 = vadd.f32 %v439, %v1771
      %v1773 = vpop.f32.mrb[0].mxu0
      %1774 = vmatprep.mubr.f32.mxu0 0.0
      %1775 = vmatmul.mubr.f32.gmra.mrb[0].mxu0 %v743
      %v1776 = vpop.f32.mrb[0].mxu0
      %v1777 = vadd.f32 %v439, %v1776
      %v1778 = vpop.f32.mrb[0].mxu0
      %1779 = vmatprep.mubr.f32.mxu0 0.0
      %1780 = vmatmul.mubr.f32.gmra.mrb[0].mxu0 %v746
      %v1781 = vpop.f32.mrb[0].mxu0
      %v1782 = vadd.f32 %v439, %v1781
      %v1783 = vpop.f32.mrb[0].mxu0
      %1784 = vmatprep.mubr.f32.mxu0 0.0
      %1785 = vmatmul.mubr.f32.gmra.mrb[0].mxu0 %v749
      %v1786 = vpop.f32.mrb[0].mxu0
      %v1787 = vadd.f32 %v439, %v1786
      %v1788 = vpop.f32.mrb[0].mxu0
      %1789 = vmatprep.mubr.f32.mxu0 0.0
      %1790 = vmatmul.mubr.f32.gmra.mrb[0].mxu0 %v752
      %v1791 = vpop.f32.mrb[0].mxu0
      %v1792 = vadd.f32 %v439, %v1791
      %v1793 = vpop.f32.mrb[0].mxu0
      %1794 = vmatprep.mubr.f32.mxu0 0.0
      %1795 = vmatmul.mubr.f32.gmra.mrb[0].mxu0 %v755
      %v1796 = vpop.f32.mrb[0].mxu0
      %v1797 = vadd.f32 %v439, %v1796
      %v1798 = vpop.f32.mrb[0].mxu0
      %1799 = vmatprep.mubr.f32.mxu0 0.0
      %1800 = vmatmul.mubr.f32.gmra.mrb[0].mxu0 %v758
      %v1801 = vpop.f32.mrb[0].mxu0
      %v1802 = vadd.f32 %v439, %v1801
      %v1803 = vpop.f32.mrb[0].mxu0
      %1804 = vmatprep.mubr.f32.mxu0 0.0
      %1805 = vmatmul.mubr.f32.gmra.mrb[0].mxu0 %v761
      %v1806 = vpop.f32.mrb[0].mxu0
      %v1807 = vadd.f32 %v439, %v1806
      %v1808 = vpop.f32.mrb[0].mxu0
      %1809 = vmatprep.mubr.f32.mxu0 0.0
      %1810 = vmatmul.mubr.f32.gmra.mrb[0].mxu0 %v764
      %v1811 = vpop.f32.mrb[0].mxu0
      %v1812 = vadd.f32 %v439, %v1811
      %v1813 = vpop.f32.mrb[0].mxu0
      %1814 = vmatprep.mubr.f32.mxu0 0.0
      %1815 = vmatmul.mubr.f32.gmra.mrb[0].mxu0 %v767
      %v1816 = vpop.f32.mrb[0].mxu0
      %v1817 = vadd.f32 %v439, %v1816
      %v1818 = vpop.f32.mrb[0].mxu0
      %1819 = vmatprep.mubr.f32.mxu0 0.0
      %1820 = vmatmul.mubr.f32.gmra.mrb[0].mxu0 %v770
      %v1821 = vpop.f32.mrb[0].mxu0
      %v1822 = vadd.f32 %v439, %v1821
      %v1823 = vpop.f32.mrb[0].mxu0
      %1824 = vmatprep.mubr.f32.mxu0 0.0
      %1825 = vmatmul.mubr.f32.gmra.mrb[0].mxu0 %v773
      %v1826 = vpop.f32.mrb[0].mxu0
      %v1827 = vadd.f32 %v439, %v1826
      %v1828 = vpop.f32.mrb[0].mxu0
      %1829 = vmatprep.mubr.f32.mxu0 0.0
      %1830 = vmatmul.mubr.f32.gmra.mrb[0].mxu0 %v776
      %v1831 = vpop.f32.mrb[0].mxu0
      %v1832 = vadd.f32 %v439, %v1831
      %v1833 = vpop.f32.mrb[0].mxu0
      %1834 = vmatprep.mubr.f32.mxu0 0.0
      %1835 = vmatmul.mubr.f32.gmra.mrb[0].mxu0 %v779
      %v1836 = vpop.f32.mrb[0].mxu0
      %v1837 = vadd.f32 %v439, %v1836
      %v1838 = vpop.f32.mrb[0].mxu0
      %1839 = vmatprep.mubr.f32.mxu0 0.0
      %1840 = vmatmul.mubr.f32.gmra.mrb[0].mxu0 %v782
      %v1841 = vpop.f32.mrb[0].mxu0
      %v1842 = vadd.f32 %v439, %v1841
      %v1843 = vpop.f32.mrb[0].mxu0
      %1844 = vmatprep.mubr.f32.mxu0 0.0
      %1845 = vmatmul.mubr.f32.gmra.mrb[0].mxu0 %v785
      %v1846 = vpop.f32.mrb[0].mxu0
      %v1847 = vadd.f32 %v439, %v1846
      %v1848 = vpop.f32.mrb[0].mxu0
      %1849 = vmatprep.mubr.f32.mxu0 0.0
      %1850 = vmatmul.mubr.f32.gmra.mrb[0].mxu0 %v788
      %v1851 = vpop.f32.mrb[0].mxu0
      %v1852 = vadd.f32 %v439, %v1851
      %v1853 = vpop.f32.mrb[0].mxu0
      %1854 = vmatprep.mubr.f32.mxu0 0.0
      %1855 = vmatmul.mubr.f32.gmra.mrb[0].mxu0 %v791
      %v1856 = vpop.f32.mrb[0].mxu0
      %v1857 = vadd.f32 %v439, %v1856
      %v1858 = vpop.f32.mrb[0].mxu0
      %1859 = vmatprep.mubr.f32.mxu0 0.0
      %1860 = vmatmul.mubr.f32.gmra.mrb[0].mxu0 %v794
      %v1861 = vpop.f32.mrb[0].mxu0
      %v1862 = vadd.f32 %v439, %v1861
      %v1863 = vpop.f32.mrb[0].mxu0
      %1864 = vmatprep.mubr.f32.mxu0 0.0
      %1865 = vmatmul.mubr.f32.gmra.mrb[0].mxu0 %v797
      %v1866 = vpop.f32.mrb[0].mxu0
      %v1867 = vadd.f32 %v439, %v1866
      %v1868 = vpop.f32.mrb[0].mxu0
      %1869 = vmatprep.mubr.f32.mxu0 0.0
      %1870 = vmatmul.mubr.f32.gmra.mrb[0].mxu0 %v800
      %v1871 = vpop.f32.mrb[0].mxu0
      %v1872 = vadd.f32 %v439, %v1871
      %v1873 = vpop.f32.mrb[0].mxu0
      %1874 = vmatprep.mubr.f32.mxu0 0.0
      %1875 = vmatmul.mubr.f32.gmra.mrb[0].mxu0 %v803
      %v1876 = vpop.f32.mrb[0].mxu0
      %v1877 = vadd.f32 %v439, %v1876
      %v1878 = vpop.f32.mrb[0].mxu0
      %1879 = vmatprep.mubr.f32.mxu0 0.0
      %1880 = vmatmul.mubr.f32.gmra.mrb[0].mxu0 %v806
      %v1881 = vpop.f32.mrb[0].mxu0
      %v1882 = vadd.f32 %v439, %v1881
      %v1883 = vpop.f32.mrb[0].mxu0
      %1884 = vmatprep.mubr.f32.mxu0 0.0
      %1885 = vmatmul.mubr.f32.gmra.mrb[0].mxu0 %v809
      %v1886 = vpop.f32.mrb[0].mxu0
      %v1887 = vadd.f32 %v439, %v1886
      %v1888 = vpop.f32.mrb[0].mxu0
      %1889 = vmatprep.mubr.f32.mxu0 0.0
      %1890 = vmatmul.mubr.f32.gmra.mrb[0].mxu0 %v812
      %v1891 = vpop.f32.mrb[0].mxu0
      %v1892 = vadd.f32 %v439, %v1891
      %v1893 = vpop.f32.mrb[0].mxu0
      %1894 = vmatprep.mubr.f32.mxu0 0.0
      %1895 = vmatmul.mubr.f32.gmra.mrb[0].mxu0 %v815
      %v1896 = vpop.f32.mrb[0].mxu0
      %v1897 = vadd.f32 %v439, %v1896
      %v1898 = vpop.f32.mrb[0].mxu0
      %1899 = vmatprep.mubr.f32.mxu0 0.0
      %1900 = vmatmul.mubr.f32.gmra.mrb[0].mxu0 %v818
      %v1901 = vpop.f32.mrb[0].mxu0
      %v1902 = vadd.f32 %v439, %v1901
      %v1903 = vpop.f32.mrb[0].mxu0
      %1904 = vmatprep.mubr.f32.mxu0 0.0
      %1905 = vmatmul.mubr.f32.gmra.mrb[0].mxu0 %v821
      %v1906 = vpop.f32.mrb[0].mxu0
      %v1907 = vadd.f32 %v439, %v1906
      %v1908 = vpop.f32.mrb[0].mxu0
      %1909 = vmatprep.mubr.f32.mxu0 0.0
      %1910 = vmatmul.mubr.f32.gmra.mrb[0].mxu0 %v824
      %v1911 = vpop.f32.mrb[0].mxu0
      %v1912 = vadd.f32 %v439, %v1911
      %v1913 = vpop.f32.mrb[0].mxu0
      %1914 = vmatprep.mubr.f32.mxu0 0.0
      %1915 = vmatmul.mubr.f32.gmra.mrb[0].mxu0 %v827
      %v1916 = vpop.f32.mrb[0].mxu0
      %v1917 = vadd.f32 %v439, %v1916
      %v1918 = vpop.f32.mrb[0].mxu0
      %1919 = vmatprep.mubr.f32.mxu0 0.0
      %1920 = vmatmul.mubr.f32.gmra.mrb[0].mxu0 %v830
      %v1921 = vpop.f32.mrb[0].mxu0
      %v1922 = vadd.f32 %v439, %v1921
      %v1923 = vpop.f32.mrb[0].mxu0
      %1924 = vmatprep.mubr.f32.mxu0 0.0
      %1925 = vmatmul.mubr.f32.gmra.mrb[0].mxu0 %v833
      %v1926 = vpop.f32.mrb[0].mxu0
      %v1927 = vadd.f32 %v439, %v1926
      %v1928 = vpop.f32.mrb[0].mxu0
      %1929 = vmatprep.mubr.f32.mxu0 0.0
      %1930 = vmatmul.mubr.f32.gmra.mrb[0].mxu0 %v836
      %v1931 = vpop.f32.mrb[0].mxu0
      %v1932 = vadd.f32 %v439, %v1931
      %v1933 = vpop.f32.mrb[0].mxu0
      %1934 = vmatprep.mubr.f32.mxu0 0.0
      %1935 = vmatmul.mubr.f32.gmra.mrb[0].mxu0 %v839
      %v1936 = vpop.f32.mrb[0].mxu0
      %v1937 = vadd.f32 %v439, %v1936
      %v1938 = vpop.f32.mrb[0].mxu0
      %1939 = vmatprep.mubr.f32.mxu0 0.0
      %1940 = vmatmul.mubr.f32.gmra.mrb[0].mxu0 %v842
      %v1941 = vpop.f32.mrb[0].mxu0
      %v1942 = vadd.f32 %v439, %v1941
      %v1943 = vpop.f32.mrb[0].mxu0
      %1944 = vmatprep.mubr.f32.mxu0 0.0
      %1945 = vmatmul.mubr.f32.gmra.mrb[0].mxu0 %v845
      %v1946 = vpop.f32.mrb[0].mxu0
      %v1947 = vadd.f32 %v439, %v1946
      %v1948 = vpop.f32.mrb[0].mxu0
      %1949 = vmatprep.mubr.f32.mxu0 0.0
      %1950 = vmatmul.mubr.f32.gmra.mrb[0].mxu0 %v848
      %v1951 = vpop.f32.mrb[0].mxu0
      %v1952 = vadd.f32 %v439, %v1951
      %v1953 = vpop.f32.mrb[0].mxu0
      %1954 = vmatprep.mubr.f32.mxu0 0.0
      %1955 = vmatmul.mubr.f32.gmra.mrb[0].mxu0 %v851
      %v1956 = vpop.f32.mrb[0].mxu0
      %v1957 = vadd.f32 %v439, %v1956
      %v1958 = vpop.f32.mrb[0].mxu0
      %1959 = vmatprep.mubr.f32.mxu0 0.0
      %1960 = vmatmul.mubr.f32.gmra.mrb[0].mxu0 %v854
      %v1961 = vpop.f32.mrb[0].mxu0
      %v1962 = vadd.f32 %v439, %v1961
      %v1963 = vpop.f32.mrb[0].mxu0
      %1964 = vmatprep.mubr.f32.mxu0 0.0
      %1965 = vmatmul.mubr.f32.gmra.mrb[0].mxu0 %v857
      %v1966 = vpop.f32.mrb[0].mxu0
      %v1967 = vadd.f32 %v439, %v1966
      %v1968 = vpop.f32.mrb[0].mxu0
      %1969 = vmatprep.mubr.f32.mxu0 0.0
      %1970 = vmatmul.mubr.f32.gmra.mrb[0].mxu0 %v860
      %v1971 = vpop.f32.mrb[0].mxu0
      %v1972 = vadd.f32 %v439, %v1971
      %v1973 = vpop.f32.mrb[0].mxu0
      %1974 = vmatprep.mubr.f32.mxu0 0.0
      %1975 = vmatmul.mubr.f32.gmra.mrb[0].mxu0 %v863
      %v1976 = vpop.f32.mrb[0].mxu0
      %v1977 = vadd.f32 %v439, %v1976
      %v1978 = vpop.f32.mrb[0].mxu0
      %1979 = vmatprep.mubr.f32.mxu0 0.0
      %1980 = vmatmul.mubr.f32.gmra.mrb[0].mxu0 %v866
      %v1981 = vpop.f32.mrb[0].mxu0
      %v1982 = vadd.f32 %v439, %v1981
      %v1983 = vpop.f32.mrb[0].mxu0
      %1984 = vmatprep.mubr.f32.mxu0 0.0
      %1985 = vmatmul.mubr.f32.gmra.mrb[0].mxu0 %v869
      %v1986 = vpop.f32.mrb[0].mxu0
      %v1987 = vadd.f32 %v439, %v1986
      %v1988 = vpop.f32.mrb[0].mxu0
      %1989 = vmatprep.mubr.f32.mxu0 0.0
      %1990 = vmatmul.mubr.f32.gmra.mrb[0].mxu0 %v872
      %v1991 = vpop.f32.mrb[0].mxu0
      %v1992 = vadd.f32 %v439, %v1991
      %v1993 = vpop.f32.mrb[0].mxu0
      %1994 = vmatprep.mubr.f32.mxu0 0.0
      %1995 = vmatmul.mubr.f32.gmra.mrb[0].mxu0 %v875
      %v1996 = vpop.f32.mrb[0].mxu0
      %v1997 = vadd.f32 %v439, %v1996
      %v1998 = vpop.f32.mrb[0].mxu0
      %1999 = vmatprep.mubr.f32.mxu0 0.0
      %2000 = vmatmul.mubr.f32.gmra.mrb[0].mxu0 %v878
      %v2001 = vpop.f32.mrb[0].mxu0
      %v2002 = vadd.f32 %v439, %v2001
      %v2003 = vpop.f32.mrb[0].mxu0
      %2004 = vmatprep.mubr.f32.mxu0 0.0
      %2005 = vmatmul.mubr.f32.gmra.mrb[0].mxu0 %v881
      %v2006 = vpop.f32.mrb[0].mxu0
      %v2007 = vadd.f32 %v439, %v2006
      %v2008 = vpop.f32.mrb[0].mxu0
      %2009 = vmatprep.mubr.f32.mxu0 0.0
      %2010 = vmatmul.mubr.f32.gmra.mrb[0].mxu0 %v884
      %v2011 = vpop.f32.mrb[0].mxu0
      %v2012 = vadd.f32 %v439, %v2011
      %v2013 = vpop.f32.mrb[0].mxu0
      %2014 = vmatprep.mubr.f32.mxu0 0.0
      %2015 = vmatmul.mubr.f32.gmra.mrb[0].mxu0 %v887
      %v2016 = vpop.f32.mrb[0].mxu0
      %v2017 = vadd.f32 %v439, %v2016
      %v2018 = vpop.f32.mrb[0].mxu0
      %2019 = vmatprep.mubr.f32.mxu0 0.0
      %2020 = vmatmul.mubr.f32.gmra.mrb[0].mxu0 %v890
      %v2021 = vpop.f32.mrb[0].mxu0
      %v2022 = vadd.f32 %v439, %v2021
      %v2023 = vpop.f32.mrb[0].mxu0
      %2024 = vmatprep.mubr.f32.mxu0 0.0
      %2025 = vmatmul.mubr.f32.gmra.mrb[0].mxu0 %v893
      %v2026 = vpop.f32.mrb[0].mxu0
      %v2027 = vadd.f32 %v439, %v2026
      %v2028 = vpop.f32.mrb[0].mxu0
      %2029 = vmatprep.mubr.f32.mxu0 0.0
      %2030 = vmatmul.mubr.f32.gmra.mrb[0].mxu0 %v896
      %v2031 = vpop.f32.mrb[0].mxu0
      %v2032 = vadd.f32 %v439, %v2031
      %v2033 = vpop.f32.mrb[0].mxu0
      %2034 = vmatprep.mubr.f32.mxu0 0.0
      %2035 = vmatmul.mubr.f32.gmra.mrb[0].mxu0 %v899
      %v2036 = vpop.f32.mrb[0].mxu0
      %v2037 = vadd.f32 %v439, %v2036
      %v2038 = vpop.f32.mrb[0].mxu0
      %2039 = vmatprep.mubr.f32.mxu0 0.0
      %2040 = vmatmul.mubr.f32.gmra.mrb[0].mxu0 %v902
      %v2041 = vpop.f32.mrb[0].mxu0
      %v2042 = vadd.f32 %v439, %v2041
      %v2043 = vpop.f32.mrb[0].mxu0
      %2044 = vmatprep.mubr.f32.mxu0 0.0
      %2045 = vmatmul.mubr.f32.gmra.mrb[0].mxu0 %v905
      %v2046 = vpop.f32.mrb[0].mxu0
      %v2047 = vadd.f32 %v439, %v2046
      %v2048 = vpop.f32.mrb[0].mxu0
      %2049 = vmatprep.mubr.f32.mxu0 0.0
      %2050 = vmatmul.mubr.f32.gmra.mrb[0].mxu0 %v908
      %v2051 = vpop.f32.mrb[0].mxu0
      %v2052 = vadd.f32 %v439, %v2051
      %v2053 = vpop.f32.mrb[0].mxu0
      %2054 = vmatprep.mubr.f32.mxu0 0.0
      %2055 = vmatmul.mubr.f32.gmra.mrb[0].mxu0 %v911
      %v2056 = vpop.f32.mrb[0].mxu0
      %v2057 = vadd.f32 %v439, %v2056
      %v2058 = vpop.f32.mrb[0].mxu0
      %2059 = vmatprep.mubr.f32.mxu0 0.0
      %2060 = vmatmul.mubr.f32.gmra.mrb[0].mxu0 %v914
      %v2061 = vpop.f32.mrb[0].mxu0
      %v2062 = vadd.f32 %v439, %v2061
      %v2063 = vpop.f32.mrb[0].mxu0
      %2064 = vmatprep.mubr.f32.mxu0 0.0
      %2065 = vmatmul.mubr.f32.gmra.mrb[0].mxu0 %v917
      %v2066 = vpop.f32.mrb[0].mxu0
      %v2067 = vadd.f32 %v439, %v2066
      %v2068 = vpop.f32.mrb[0].mxu0
      %2069 = vmatprep.mubr.f32.mxu0 0.0
      %2070 = vmatmul.mubr.f32.gmra.mrb[0].mxu0 %v920
      %v2071 = vpop.f32.mrb[0].mxu0
      %v2072 = vadd.f32 %v439, %v2071
      %v2073 = vpop.f32.mrb[0].mxu0
      %2074 = vmatprep.mubr.f32.mxu0 0.0
      %2075 = vmatmul.mubr.f32.gmra.mrb[0].mxu0 %v923
      %v2076 = vpop.f32.mrb[0].mxu0
      %v2077 = vadd.f32 %v439, %v2076
      %v2078 = vpop.f32.mrb[0].mxu0
      %2079 = vmatprep.mubr.f32.mxu0 0.0
      %2080 = vmatmul.mubr.f32.gmra.mrb[0].mxu0 %v926
      %v2081 = vpop.f32.mrb[0].mxu0
      %v2082 = vadd.f32 %v439, %v2081
      %v2083 = vpop.f32.mrb[0].mxu0
      %2084 = vmatprep.mubr.f32.mxu0 0.0
      %2085 = vmatmul.mubr.f32.gmra.mrb[0].mxu0 %v929
      %v2086 = vpop.f32.mrb[0].mxu0
      %v2087 = vadd.f32 %v439, %v2086
      %v2088 = vpop.f32.mrb[0].mxu0
      %2089 = vmatprep.mubr.f32.mxu0 0.0
      %2090 = vmatmul.mubr.f32.gmra.mrb[0].mxu0 %v932
      %v2091 = vpop.f32.mrb[0].mxu0
      %v2092 = vadd.f32 %v439, %v2091
      %v2093 = vpop.f32.mrb[0].mxu0
      %2094 = vmatprep.mubr.f32.mxu0 0.0
      %2095 = vmatmul.mubr.f32.gmra.mrb[0].mxu0 %v935
      %v2096 = vpop.f32.mrb[0].mxu0
      %v2097 = vadd.f32 %v439, %v2096
      %v2098 = vpop.f32.mrb[0].mxu0
      %2099 = vmatprep.mubr.f32.mxu0 0.0
      %2100 = vmatmul.mubr.f32.gmra.mrb[0].mxu0 %v938
      %v2101 = vpop.f32.mrb[0].mxu0
      %v2102 = vadd.f32 %v439, %v2101
      %v2103 = vpop.f32.mrb[0].mxu0
      %2104 = vmatprep.mubr.f32.mxu0 0.0
      %2105 = vmatmul.mubr.f32.gmra.mrb[0].mxu0 %v941
      %v2106 = vpop.f32.mrb[0].mxu0
      %v2107 = vadd.f32 %v439, %v2106
      %v2108 = vpop.f32.mrb[0].mxu0
      %2109 = vmatprep.mubr.f32.mxu0 0.0
      %2110 = vmatmul.mubr.f32.gmra.mrb[0].mxu0 %v944
      %v2111 = vpop.f32.mrb[0].mxu0
      %v2112 = vadd.f32 %v439, %v2111
      %v2113 = vpop.f32.mrb[0].mxu0
      %2114 = vmatprep.mubr.f32.mxu0 0.0
      %2115 = vmatmul.mubr.f32.gmra.mrb[0].mxu0 %v947
      %v2116 = vpop.f32.mrb[0].mxu0
      %v2117 = vadd.f32 %v439, %v2116
      %v2118 = vpop.f32.mrb[0].mxu0
      %2119 = vmatprep.mubr.f32.mxu0 0.0
      %2120 = vmatmul.mubr.f32.gmra.mrb[0].mxu0 %v950
      %v2121 = vpop.f32.mrb[0].mxu0
      %v2122 = vadd.f32 %v439, %v2121
      %v2123 = vpop.f32.mrb[0].mxu0
      %2124 = vmatprep.mubr.f32.mxu0 0.0
      %2125 = vmatmul.mubr.f32.gmra.mrb[0].mxu0 %v953
      %v2126 = vpop.f32.mrb[0].mxu0
      %v2127 = vadd.f32 %v439, %v2126
      %v2128 = vpop.f32.mrb[0].mxu0
      %2129 = vmatprep.mubr.f32.mxu0 0.0
      %2130 = vmatmul.mubr.f32.gmra.mrb[0].mxu0 %v956
      %v2131 = vpop.f32.mrb[0].mxu0
      %v2132 = vadd.f32 %v439, %v2131
      %v2133 = vpop.f32.mrb[0].mxu0
      %2134 = vmatprep.mubr.f32.mxu0 0.0
      %2135 = vmatmul.mubr.f32.gmra.mrb[0].mxu0 %v959
      %v2136 = vpop.f32.mrb[0].mxu0
      %v2137 = vadd.f32 %v439, %v2136
      %v2138 = vpop.f32.mrb[0].mxu0
      %2139 = vmatprep.mubr.f32.mxu0 0.0
      %2140 = vmatmul.mubr.f32.gmra.mrb[0].mxu0 %v962
      %v2141 = vpop.f32.mrb[0].mxu0
      %v2142 = vadd.f32 %v439, %v2141
      %v2143 = vpop.f32.mrb[0].mxu0
      %2144 = vmatprep.mubr.f32.mxu0 0.0
      %2145 = vmatmul.mubr.f32.gmra.mrb[0].mxu0 %v965
      %v2146 = vpop.f32.mrb[0].mxu0
      %v2147 = vadd.f32 %v439, %v2146
      %v2148 = vpop.f32.mrb[0].mxu0
      %2149 = vmatprep.mubr.f32.mxu0 0.0
      %2150 = vmatmul.mubr.f32.gmra.mrb[0].mxu0 %v968
      %v2151 = vpop.f32.mrb[0].mxu0
      %v2152 = vadd.f32 %v439, %v2151
      %v2153 = vpop.f32.mrb[0].mxu0
      %2154 = vmatprep.mubr.f32.mxu0 0.0
      %2155 = vmatmul.mubr.f32.gmra.mrb[0].mxu0 %v971
      %v2156 = vpop.f32.mrb[0].mxu0
      %v2157 = vadd.f32 %v439, %v2156
      %v2158 = vpop.f32.mrb[0].mxu0
      %2159 = vmatprep.mubr.f32.mxu0 0.0
      %2160 = vmatmul.mubr.f32.gmra.mrb[0].mxu0 %v974
      %v2161 = vpop.f32.mrb[0].mxu0
      %v2162 = vadd.f32 %v439, %v2161
      %v2163 = vpop.f32.mrb[0].mxu0
      %2164 = vmatprep.mubr.f32.mxu0 0.0
      %2165 = vmatmul.mubr.f32.gmra.mrb[0].mxu0 %v977
      %v2166 = vpop.f32.mrb[0].mxu0
      %v2167 = vadd.f32 %v439, %v2166
      %v2168 = vpop.f32.mrb[0].mxu0
      %2169 = vmatprep.mubr.f32.mxu0 0.0
      %2170 = vmatmul.mubr.f32.gmra.mrb[0].mxu0 %v980
      %v2171 = vpop.f32.mrb[0].mxu0
      %v2172 = vadd.f32 %v439, %v2171
      %v2173 = vpop.f32.mrb[0].mxu0
      %2174 = vmatprep.mubr.f32.mxu0 0.0
      %2175 = vmatmul.mubr.f32.gmra.mrb[0].mxu0 %v983
      %v2176 = vpop.f32.mrb[0].mxu0
      %v2177 = vadd.f32 %v439, %v2176
      %v2178 = vpop.f32.mrb[0].mxu0
      %2179 = vmatprep.mubr.f32.mxu0 0.0
      %2180 = vmatmul.mubr.f32.gmra.mrb[0].mxu0 %v986
      %v2181 = vpop.f32.mrb[0].mxu0
      %v2182 = vadd.f32 %v439, %v2181
      %v2183 = vpop.f32.mrb[0].mxu0
      %2184 = vmatprep.mubr.f32.mxu0 0.0
      %2185 = vmatmul.mubr.f32.gmra.mrb[0].mxu0 %v989
      %v2186 = vpop.f32.mrb[0].mxu0
      %v2187 = vadd.f32 %v439, %v2186
      %v2188 = vpop.f32.mrb[0].mxu0
      %2189 = vmatprep.mubr.f32.mxu0 0.0
      %2190 = vmatmul.mubr.f32.gmra.mrb[0].mxu0 %v992
      %v2191 = vpop.f32.mrb[0].mxu0
      %v2192 = vadd.f32 %v439, %v2191
      %v2193 = vpop.f32.mrb[0].mxu0
      %2194 = vmatprep.mubr.f32.mxu0 0.0
      %2195 = vmatmul.mubr.f32.gmra.mrb[0].mxu0 %v995
      %v2196 = vpop.f32.mrb[0].mxu0
      %v2197 = vadd.f32 %v439, %v2196
      %v2198 = vpop.f32.mrb[0].mxu0
      %2199 = vmatprep.mubr.f32.mxu0 0.0
      %2200 = vmatmul.mubr.f32.gmra.mrb[0].mxu0 %v998
      %v2201 = vpop.f32.mrb[0].mxu0
      %v2202 = vadd.f32 %v439, %v2201
      %v2203 = vpop.f32.mrb[0].mxu0
      %2204 = vmatprep.mubr.f32.mxu0 0.0
      %2205 = vmatmul.mubr.f32.gmra.mrb[0].mxu0 %v1001
      %v2206 = vpop.f32.mrb[0].mxu0
      %v2207 = vadd.f32 %v439, %v2206
      %v2208 = vpop.f32.mrb[0].mxu0
      %2209 = vmatprep.mubr.f32.mxu0 0.0
      %2210 = vmatmul.mubr.f32.gmra.mrb[0].mxu0 %v1004
      %v2211 = vpop.f32.mrb[0].mxu0
      %v2212 = vadd.f32 %v439, %v2211
      %v2213 = vpop.f32.mrb[0].mxu0
      %2214 = vmatprep.mubr.f32.mxu0 0.0
      %2215 = vmatmul.mubr.f32.gmra.mrb[0].mxu0 %v1007
      %v2216 = vpop.f32.mrb[0].mxu0
      %v2217 = vadd.f32 %v439, %v2216
      %v2218 = vpop.f32.mrb[0].mxu0
      %2219 = vmatprep.mubr.f32.mxu0 0.0
      %2220 = vmatmul.mubr.f32.gmra.mrb[0].mxu0 %v1010
      %v2221 = vpop.f32.mrb[0].mxu0
      %v2222 = vadd.f32 %v439, %v2221
      %v2223 = vpop.f32.mrb[0].mxu0
      %2224 = vmatprep.mubr.f32.mxu0 0.0
      %2225 = vmatmul.mubr.f32.gmra.mrb[0].mxu0 %v1013
      %v2226 = vpop.f32.mrb[0].mxu0
      %v2227 = vadd.f32 %v439, %v2226
      %v2228 = vpop.f32.mrb[0].mxu0
      %2229 = vmatprep.mubr.f32.mxu0 0.0
      %2230 = vmatmul.mubr.f32.gmra.mrb[0].mxu0 %v1016
      %v2231 = vpop.f32.mrb[0].mxu0
      %v2232 = vadd.f32 %v439, %v2231
      %v2233 = vpop.f32.mrb[0].mxu0
      %2234 = vmatprep.mubr.f32.mxu0 0.0
      %2235 = vmatmul.mubr.f32.gmra.mrb[0].mxu0 %v1019
      %v2236 = vpop.f32.mrb[0].mxu0
      %v2237 = vadd.f32 %v439, %v2236
      %v2238 = vpop.f32.mrb[0].mxu0
      %2239 = vmatprep.mubr.f32.mxu0 0.0
      %2240 = vmatmul.mubr.f32.gmra.mrb[0].mxu0 %v1022
      %v2241 = vpop.f32.mrb[0].mxu0
      %v2242 = vadd.f32 %v439, %v2241
      %v2243 = vpop.f32.mrb[0].mxu0
      %2244 = vmatprep.mubr.f32.mxu0 0.0
      %2245 = vmatmul.mubr.f32.gmra.mrb[0].mxu0 %v1025
      %v2246 = vpop.f32.mrb[0].mxu0
      %v2247 = vadd.f32 %v439, %v2246
      %v2248 = vpop.f32.mrb[0].mxu0
      %2249 = vmatprep.mubr.f32.mxu0 0.0
      %2250 = vmatmul.mubr.f32.gmra.mrb[0].mxu0 %v1028
      %v2251 = vpop.f32.mrb[0].mxu0
      %v2252 = vadd.f32 %v439, %v2251
      %v2253 = vpop.f32.mrb[0].mxu0
      %2254 = vmatprep.mubr.f32.mxu0 0.0
      %2255 = vmatmul.mubr.f32.gmra.mrb[0].mxu0 %v1031
      %v2256 = vpop.f32.mrb[0].mxu0
      %v2257 = vadd.f32 %v439, %v2256
      %v2258 = vpop.f32.mrb[0].mxu0
      %2259 = vmatprep.mubr.f32.mxu0 0.0
      %2260 = vmatmul.mubr.f32.gmra.mrb[0].mxu0 %v1034
      %v2261 = vpop.f32.mrb[0].mxu0
      %v2262 = vadd.f32 %v439, %v2261
      %v2263 = vpop.f32.mrb[0].mxu0
      %2264 = vmatprep.mubr.f32.mxu0 0.0
      %2265 = vmatmul.mubr.f32.gmra.mrb[0].mxu0 %v1037
      %v2266 = vpop.f32.mrb[0].mxu0
      %v2267 = vadd.f32 %v439, %v2266
      %v2268 = vpop.f32.mrb[0].mxu0
      %2269 = vmatprep.mubr.f32.mxu0 0.0
      %2270 = vmatmul.mubr.f32.gmra.mrb[0].mxu0 %v1040
      %v2271 = vpop.f32.mrb[0].mxu0
      %v2272 = vadd.f32 %v439, %v2271
      %v2273 = vpop.f32.mrb[0].mxu0
      %2274 = vmatprep.mubr.f32.mxu0 0.0
      %2275 = vmatmul.mubr.f32.gmra.mrb[0].mxu0 %v1043
      %v2276 = vpop.f32.mrb[0].mxu0
      %v2277 = vadd.f32 %v439, %v2276
      %v2278 = vpop.f32.mrb[0].mxu0
      %2279 = vmatprep.mubr.f32.mxu0 0.0
      %2280 = vmatmul.mubr.f32.gmra.mrb[0].mxu0 %v1046
      %v2281 = vpop.f32.mrb[0].mxu0
      %v2282 = vadd.f32 %v439, %v2281
      %v2283 = vpop.f32.mrb[0].mxu0
      %2284 = vmatprep.mubr.f32.mxu0 0.0
      %2285 = vmatmul.mubr.f32.gmra.mrb[0].mxu0 %v1049
      %v2286 = vpop.f32.mrb[0].mxu0
      %v2287 = vadd.f32 %v439, %v2286
      %v2288 = vpop.f32.mrb[0].mxu0
      %2289 = vmatprep.mubr.f32.mxu0 0.0
      %2290 = vmatmul.mubr.f32.gmra.mrb[0].mxu0 %v1052
      %v2291 = vpop.f32.mrb[0].mxu0
      %v2292 = vadd.f32 %v439, %v2291
      %v2293 = vpop.f32.mrb[0].mxu0
      %2294 = vmatprep.mubr.f32.mxu0 0.0
      %2295 = vmatmul.mubr.f32.gmra.mrb[0].mxu0 %v1055
      %v2296 = vpop.f32.mrb[0].mxu0
      %v2297 = vadd.f32 %v439, %v2296
      %v2298 = vpop.f32.mrb[0].mxu0
      %2299 = vmatprep.mubr.f32.mxu0 0.0
      %2300 = vmatmul.mubr.f32.gmra.mrb[0].mxu0 %v1058
      %v2301 = vpop.f32.mrb[0].mxu0
      %v2302 = vadd.f32 %v439, %v2301
      %v2303 = vpop.f32.mrb[0].mxu0
      %2304 = vmatprep.mubr.f32.mxu0 0.0
      %2305 = vmatmul.mubr.f32.gmra.mrb[0].mxu0 %v1061
      %v2306 = vpop.f32.mrb[0].mxu0
      %v2307 = vadd.f32 %v439, %v2306
      %v2308 = vpop.f32.mrb[0].mxu0
      %2309 = vmatprep.mubr.f32.mxu0 0.0
      %2310 = vmatmul.mubr.f32.gmra.mrb[0].mxu0 %v1064
      %v2311 = vpop.f32.mrb[0].mxu0
      %v2312 = vadd.f32 %v439, %v2311
      %v2313 = vpop.f32.mrb[0].mxu0
      %2314 = vmatprep.mubr.f32.mxu0 0.0
      %2315 = vmatmul.mubr.f32.gmra.mrb[0].mxu0 %v1067
      %v2316 = vpop.f32.mrb[0].mxu0
      %v2317 = vadd.f32 %v439, %v2316
      %v2318 = vpop.f32.mrb[0].mxu0
      %2319 = vmatprep.mubr.f32.mxu0 0.0
      %2320 = vmatmul.mubr.f32.gmra.mrb[0].mxu0 %v1070
      %v2321 = vpop.f32.mrb[0].mxu0
      %v2322 = vadd.f32 %v439, %v2321
      %v2323 = vpop.f32.mrb[0].mxu0
      %2324 = vmatprep.mubr.f32.mxu0 0.0
      %2325 = vmatmul.mubr.f32.gmra.mrb[0].mxu0 %v1073
      %v2326 = vpop.f32.mrb[0].mxu0
      %v2327 = vadd.f32 %v439, %v2326
      %v2328 = vpop.f32.mrb[0].mxu0
      %2329 = vmatprep.mubr.f32.mxu0 0.0
      %2330 = vmatmul.mubr.f32.gmra.mrb[0].mxu0 %v1076
      %v2331 = vpop.f32.mrb[0].mxu0
      %v2332 = vadd.f32 %v439, %v2331
      %v2333 = vpop.f32.mrb[0].mxu0
      %2334 = vmatprep.mubr.f32.mxu0 0.0
      %2335 = vmatmul.mubr.f32.gmra.mrb[0].mxu0 %v1079
      %v2336 = vpop.f32.mrb[0].mxu0
      %v2337 = vadd.f32 %v439, %v2336
      %v2338 = vpop.f32.mrb[0].mxu0
      %2339 = vmatprep.mubr.f32.mxu0 0.0
      %2340 = vmatmul.mubr.f32.gmra.mrb[0].mxu0 %v1082
      %v2341 = vpop.f32.mrb[0].mxu0
      %v2342 = vadd.f32 %v439, %v2341
      %v2343 = vpop.f32.mrb[0].mxu0
      %2344 = vmatprep.mubr.f32.mxu0 0.0
      %2345 = vmatmul.mubr.f32.gmra.mrb[0].mxu0 %v1085
      %v2346 = vpop.f32.mrb[0].mxu0
      %v2347 = vadd.f32 %v439, %v2346
      %v2348 = vpop.f32.mrb[0].mxu0
      %2349 = vmatprep.mubr.f32.mxu0 0.0
      %2350 = vmatmul.mubr.f32.gmra.mrb[0].mxu0 %v1088
      %v2351 = vpop.f32.mrb[0].mxu0
      %v2352 = vadd.f32 %v439, %v2351
      %v2353 = vpop.f32.mrb[0].mxu0
      %2354 = vmatprep.mubr.f32.mxu0 0.0
      %2355 = vmatmul.mubr.f32.gmra.mrb[0].mxu0 %v1091
      %v2356 = vpop.f32.mrb[0].mxu0
      %v2357 = vadd.f32 %v439, %v2356
      %v2358 = vpop.f32.mrb[0].mxu0
      %2359 = vmatprep.mubr.f32.mxu0 0.0
      %2360 = vmatmul.mubr.f32.gmra.mrb[0].mxu0 %v1094
      %v2361 = vpop.f32.mrb[0].mxu0
      %v2362 = vadd.f32 %v439, %v2361
      %v2363 = vpop.f32.mrb[0].mxu0
      %2364 = vmatprep.mubr.f32.mxu0 0.0
      %2365 = vmatmul.mubr.f32.gmra.mrb[0].mxu0 %v1097
      %v2366 = vpop.f32.mrb[0].mxu0
      %v2367 = vadd.f32 %v439, %v2366
      %v2368 = vpop.f32.mrb[0].mxu0
      %2369 = vmatprep.mubr.f32.mxu0 0.0
      %2370 = vmatmul.mubr.f32.gmra.mrb[0].mxu0 %v1100
      %v2371 = vpop.f32.mrb[0].mxu0
      %v2372 = vadd.f32 %v439, %v2371
      %v2373 = vpop.f32.mrb[0].mxu0
      %2374 = vmatprep.mubr.f32.mxu0 0.0
      %2375 = vmatmul.mubr.f32.gmra.mrb[0].mxu0 %v1103
      %v2376 = vpop.f32.mrb[0].mxu0
      %v2377 = vadd.f32 %v439, %v2376
      %v2378 = vpop.f32.mrb[0].mxu0
      %2379 = vmatprep.mubr.f32.mxu0 0.0
      %2380 = vmatmul.mubr.f32.gmra.mrb[0].mxu0 %v1106
      %v2381 = vpop.f32.mrb[0].mxu0
      %v2382 = vadd.f32 %v439, %v2381
      %v2383 = vpop.f32.mrb[0].mxu0
      %2384 = vmatprep.mubr.f32.mxu0 0.0
      %2385 = vmatmul.mubr.f32.gmra.mrb[0].mxu0 %v1109
      %v2386 = vpop.f32.mrb[0].mxu0
      %v2387 = vadd.f32 %v439, %v2386
      %v2388 = vpop.f32.mrb[0].mxu0
      %2389 = vmatprep.mubr.f32.mxu0 0.0
      %2390 = vmatmul.mubr.f32.gmra.mrb[0].mxu0 %v1112
      %v2391 = vpop.f32.mrb[0].mxu0
      %v2392 = vadd.f32 %v439, %v2391
      %v2393 = vpop.f32.mrb[0].mxu0
      %2394 = vmatprep.mubr.f32.mxu0 0.0
      %2395 = vmatmul.mubr.f32.gmra.mrb[0].mxu0 %v1115
      %v2396 = vpop.f32.mrb[0].mxu0
      %v2397 = vadd.f32 %v439, %v2396
      %v2398 = vpop.f32.mrb[0].mxu0
      %2399 = vmatprep.mubr.f32.mxu0 0.0
      %2400 = vmatmul.mubr.f32.gmra.mrb[0].mxu0 %v1118
      %v2401 = vpop.f32.mrb[0].mxu0
      %v2402 = vadd.f32 %v439, %v2401
      %v2403 = vpop.f32.mrb[0].mxu0
      %2404 = vmatprep.mubr.f32.mxu0 0.0
      %2405 = vmatmul.mubr.f32.gmra.mrb[0].mxu0 %v1121
      %v2406 = vpop.f32.mrb[0].mxu0
      %v2407 = vadd.f32 %v439, %v2406
      %v2408 = vpop.f32.mrb[0].mxu0
      %2409 = vmatprep.mubr.f32.mxu0 0.0
      %2410 = vmatmul.mubr.f32.gmra.mrb[0].mxu0 %v1124
      %v2411 = vpop.f32.mrb[0].mxu0
      %v2412 = vadd.f32 %v439, %v2411
      %v2413 = vpop.f32.mrb[0].mxu0
      %2414 = vmatprep.mubr.f32.mxu0 0.0
      %2415 = vmatmul.mubr.f32.gmra.mrb[0].mxu0 %v1127
      %v2416 = vpop.f32.mrb[0].mxu0
      %v2417 = vadd.f32 %v439, %v2416
      %v2418 = vpop.f32.mrb[0].mxu0
      %2419 = vmatprep.mubr.f32.mxu0 0.0
      %2420 = vmatmul.mubr.f32.gmra.mrb[0].mxu0 %v1130
      %v2421 = vpop.f32.mrb[0].mxu0
      %v2422 = vadd.f32 %v439, %v2421
      %v2423 = vpop.f32.mrb[0].mxu0
      %2424 = vmatprep.mubr.f32.mxu0 0.0
      %2425 = vmatmul.mubr.f32.gmra.mrb[0].mxu0 %v1133
      %v2426 = vpop.f32.mrb[0].mxu0
      %v2427 = vadd.f32 %v439, %v2426
      %v2428 = vpop.f32.mrb[0].mxu0
      %2429 = vmatprep.mubr.f32.mxu0 0.0
      %2430 = vmatmul.mubr.f32.gmra.mrb[0].mxu0 %v1136
      %v2431 = vpop.f32.mrb[0].mxu0
      %v2432 = vadd.f32 %v439, %v2431
      %v2433 = vpop.f32.mrb[0].mxu0
      %2434 = vmatprep.mubr.f32.mxu0 0.0
      %2435 = vmatmul.mubr.f32.gmra.mrb[0].mxu0 %v1139
      %v2436 = vpop.f32.mrb[0].mxu0
      %v2437 = vadd.f32 %v439, %v2436
      %v2438 = vpop.f32.mrb[0].mxu0
      %2439 = vmatprep.mubr.f32.mxu0 0.0
      %2440 = vmatmul.mubr.f32.gmra.mrb[0].mxu0 %v1142
      %v2441 = vpop.f32.mrb[0].mxu0
      %v2442 = vadd.f32 %v439, %v2441
      %v2443 = vpop.f32.mrb[0].mxu0
      %2444 = vmatprep.mubr.f32.mxu0 0.0
      %2445 = vmatmul.mubr.f32.gmra.mrb[0].mxu0 %v1145
      %v2446 = vpop.f32.mrb[0].mxu0
      %v2447 = vadd.f32 %v439, %v2446
      %v2448 = vpop.f32.mrb[0].mxu0
      %2449 = vmatprep.mubr.f32.mxu0 0.0
      %2450 = vmatmul.mubr.f32.gmra.mrb[0].mxu0 %v1148
      %v2451 = vpop.f32.mrb[0].mxu0
      %v2452 = vadd.f32 %v439, %v2451
      %v2453 = vpop.f32.mrb[0].mxu0
      %2454 = vmatprep.mubr.f32.mxu0 0.0
      %2455 = vmatmul.mubr.f32.gmra.mrb[0].mxu0 %v1151
      %v2456 = vpop.f32.mrb[0].mxu0
      %v2457 = vadd.f32 %v439, %v2456
      %v2458 = vpop.f32.mrb[0].mxu0
      %2459 = vmatprep.mubr.f32.mxu0 0.0
      %2460 = vmatmul.mubr.f32.gmra.mrb[0].mxu0 %v1154
      %v2461 = vpop.f32.mrb[0].mxu0
      %v2462 = vadd.f32 %v439, %v2461
      %v2463 = vpop.f32.mrb[0].mxu0
      %2464 = vmatprep.mubr.f32.mxu0 0.0
      %2465 = vmatmul.mubr.f32.gmra.mrb[0].mxu0 %v1157
      %v2466 = vpop.f32.mrb[0].mxu0
      %v2467 = vadd.f32 %v439, %v2466
      %v2468 = vpop.f32.mrb[0].mxu0
      %2469 = vmatprep.mubr.f32.mxu0 0.0
      %2470 = vmatmul.mubr.f32.gmra.mrb[0].mxu0 %v1160
      %v2471 = vpop.f32.mrb[0].mxu0
      %v2472 = vadd.f32 %v439, %v2471
      %v2473 = vpop.f32.mrb[0].mxu0
      %2474 = vmatprep.mubr.f32.mxu0 0.0
      %2475 = vmatmul.mubr.f32.gmra.mrb[0].mxu0 %v1163
      %v2476 = vpop.f32.mrb[0].mxu0
      %v2477 = vadd.f32 %v439, %v2476
      %v2478 = vpop.f32.mrb[0].mxu0
      %2479 = vmatprep.mubr.f32.mxu0 0.0
      %2480 = vmatmul.mubr.f32.gmra.mrb[0].mxu0 %v1166
      %v2481 = vpop.f32.mrb[0].mxu0
      %v2482 = vadd.f32 %v439, %v2481
      %v2483 = vpop.f32.mrb[0].mxu0
      %2484 = vmatprep.mubr.f32.mxu0 0.0
      %2485 = vmatmul.mubr.f32.gmra.mrb[0].mxu0 %v1169
      %v2486 = vpop.f32.mrb[0].mxu0
      %v2487 = vadd.f32 %v439, %v2486
      %v2488 = vpop.f32.mrb[0].mxu0
      %2489 = vmatprep.mubr.f32.mxu0 0.0
      %2490 = vmatmul.mubr.f32.gmra.mrb[0].mxu0 %v1172
      %v2491 = vpop.f32.mrb[0].mxu0
      %v2492 = vadd.f32 %v439, %v2491
      %v2493 = vpop.f32.mrb[0].mxu0
      %2494 = vmatprep.mubr.f32.mxu0 0.0
      %2495 = vmatmul.mubr.f32.gmra.mrb[0].mxu0 %v1175
      %v2496 = vpop.f32.mrb[0].mxu0
      %v2497 = vadd.f32 %v439, %v2496
      %v2498 = vpop.f32.mrb[0].mxu0
      %2499 = vmatprep.mubr.f32.mxu0 0.0
      %2500 = vmatmul.mubr.f32.gmra.mrb[0].mxu0 %v1178
      %v2501 = vpop.f32.mrb[0].mxu0
      %v2502 = vadd.f32 %v439, %v2501
      %v2503 = vpop.f32.mrb[0].mxu0
      %2504 = vmatprep.mubr.f32.mxu0 0.0
      %2505 = vmatmul.mubr.f32.gmra.mrb[0].mxu0 %v1181
      %v2506 = vpop.f32.mrb[0].mxu0
      %v2507 = vadd.f32 %v439, %v2506
      %v2508 = vpop.f32.mrb[0].mxu0
      %2509 = vmatprep.mubr.f32.mxu0 0.0
      %2510 = vmatmul.mubr.f32.gmra.mrb[0].mxu0 %v1184
      %v2511 = vpop.f32.mrb[0].mxu0
      %v2512 = vadd.f32 %v439, %v2511
      %v2513 = vpop.f32.mrb[0].mxu0
      %2514 = vmatprep.mubr.f32.mxu0 0.0
      %2515 = vmatmul.mubr.f32.gmra.mrb[0].mxu0 %v1187
      %v2516 = vpop.f32.mrb[0].mxu0
      %v2517 = vadd.f32 %v439, %v2516
      %v2518 = vpop.f32.mrb[0].mxu0
      %2519 = vmatprep.mubr.f32.mxu0 0.0
      %2520 = vmatmul.mubr.f32.gmra.mrb[0].mxu0 %v1190
      %v2521 = vpop.f32.mrb[0].mxu0
      %v2522 = vadd.f32 %v439, %v2521
      %v2523 = vpop.f32.mrb[0].mxu0
      %2524 = vmatprep.mubr.f32.mxu0 0.0
      %2525 = vmatmul.mubr.f32.gmra.mrb[0].mxu0 %v1193
      %v2526 = vpop.f32.mrb[0].mxu0
      %v2527 = vadd.f32 %v439, %v2526
      %v2528 = vpop.f32.mrb[0].mxu0
      %2529 = vmatprep.mubr.f32.mxu0 0.0
      %2530 = vmatmul.mubr.f32.gmra.mrb[0].mxu0 %v1196
      %v2531 = vpop.f32.mrb[0].mxu0
      %v2532 = vadd.f32 %v439, %v2531
      %v2533 = vpop.f32.mrb[0].mxu0
      %2534 = vmatprep.mubr.f32.mxu0 0.0
      %2535 = vmatmul.mubr.f32.gmra.mrb[0].mxu0 %v1199
      %v2536 = vpop.f32.mrb[0].mxu0
      %v2537 = vadd.f32 %v439, %v2536
      %v2538 = vpop.f32.mrb[0].mxu0
      %2539 = vmatprep.mubr.f32.mxu0 0.0
      %2540 = vmatmul.mubr.f32.gmra.mrb[0].mxu0 %v1202
      %v2541 = vpop.f32.mrb[0].mxu0
      %v2542 = vadd.f32 %v439, %v2541
      %v2543 = vpop.f32.mrb[0].mxu0
      %2544 = vmatprep.mubr.f32.mxu0 0.0
      %2545 = vmatmul.mubr.f32.gmra.mrb[0].mxu0 %v1205
      %v2546 = vpop.f32.mrb[0].mxu0
      %v2547 = vadd.f32 %v439, %v2546
      %v2548 = vpop.f32.mrb[0].mxu0
      %2549 = vmatprep.mubr.f32.mxu0 0.0
      %2550 = vmatmul.mubr.f32.gmra.mrb[0].mxu0 %v1208
      %v2551 = vpop.f32.mrb[0].mxu0
      %v2552 = vadd.f32 %v439, %v2551
      %v2553 = vpop.f32.mrb[0].mxu0
      %2554 = vdwg.mxu0
      %v2555 = vmax.f32 %v1277, 0.0
      %v2556 = vmax.f32 %v1282, 0.0
      %v2557 = vmax.f32 %v1287, 0.0
      %v2558 = vmax.f32 %v1292, 0.0
      %v2559 = vmax.f32 %v1297, 0.0
      %v2560 = vmax.f32 %v1302, 0.0
      %v2561 = vmax.f32 %v1307, 0.0
      %v2562 = vmax.f32 %v1312, 0.0
      %v2563 = vmax.f32 %v1317, 0.0
      %v2564 = vmax.f32 %v1322, 0.0
      %v2565 = vmax.f32 %v1327, 0.0
      %v2566 = vmax.f32 %v1332, 0.0
      %v2567 = vmax.f32 %v1337, 0.0
      %v2568 = vmax.f32 %v1342, 0.0
      %v2569 = vmax.f32 %v1347, 0.0
      %v2570 = vmax.f32 %v1352, 0.0
      %v2571 = vmax.f32 %v1357, 0.0
      %v2572 = vmax.f32 %v1362, 0.0
      %v2573 = vmax.f32 %v1367, 0.0
      %v2574 = vmax.f32 %v1372, 0.0
      %v2575 = vmax.f32 %v1377, 0.0
      %v2576 = vmax.f32 %v1382, 0.0
      %v2577 = vmax.f32 %v1387, 0.0
      %v2578 = vmax.f32 %v1392, 0.0
      %v2579 = vmax.f32 %v1397, 0.0
      %v2580 = vmax.f32 %v1402, 0.0
      %v2581 = vmax.f32 %v1407, 0.0
      %v2582 = vmax.f32 %v1412, 0.0
      %v2583 = vmax.f32 %v1417, 0.0
      %v2584 = vmax.f32 %v1422, 0.0
      %v2585 = vmax.f32 %v1427, 0.0
      %v2586 = vmax.f32 %v1432, 0.0
      %v2587 = vmax.f32 %v1437, 0.0
      %v2588 = vmax.f32 %v1442, 0.0
      %v2589 = vmax.f32 %v1447, 0.0
      %v2590 = vmax.f32 %v1452, 0.0
      %v2591 = vmax.f32 %v1457, 0.0
      %v2592 = vmax.f32 %v1462, 0.0
      %v2593 = vmax.f32 %v1467, 0.0
      %v2594 = vmax.f32 %v1472, 0.0
      %v2595 = vmax.f32 %v1477, 0.0
      %v2596 = vmax.f32 %v1482, 0.0
      %v2597 = vmax.f32 %v1487, 0.0
      %v2598 = vmax.f32 %v1492, 0.0
      %v2599 = vmax.f32 %v1497, 0.0
      %v2600 = vmax.f32 %v1502, 0.0
      %v2601 = vmax.f32 %v1507, 0.0
      %v2602 = vmax.f32 %v1512, 0.0
      %v2603 = vmax.f32 %v1517, 0.0
      %v2604 = vmax.f32 %v1522, 0.0
      %v2605 = vmax.f32 %v1527, 0.0
      %v2606 = vmax.f32 %v1532, 0.0
      %v2607 = vmax.f32 %v1537, 0.0
      %v2608 = vmax.f32 %v1542, 0.0
      %v2609 = vmax.f32 %v1547, 0.0
      %v2610 = vmax.f32 %v1552, 0.0
      %v2611 = vmax.f32 %v1557, 0.0
      %v2612 = vmax.f32 %v1562, 0.0
      %v2613 = vmax.f32 %v1567, 0.0
      %v2614 = vmax.f32 %v1572, 0.0
      %v2615 = vmax.f32 %v1577, 0.0
      %v2616 = vmax.f32 %v1582, 0.0
      %v2617 = vmax.f32 %v1587, 0.0
      %v2618 = vmax.f32 %v1592, 0.0
      %v2619 = vmax.f32 %v1597, 0.0
      %v2620 = vmax.f32 %v1602, 0.0
      %v2621 = vmax.f32 %v1607, 0.0
      %v2622 = vmax.f32 %v1612, 0.0
      %v2623 = vmax.f32 %v1617, 0.0
      %v2624 = vmax.f32 %v1622, 0.0
      %v2625 = vmax.f32 %v1627, 0.0
      %v2626 = vmax.f32 %v1632, 0.0
      %v2627 = vmax.f32 %v1637, 0.0
      %v2628 = vmax.f32 %v1642, 0.0
      %v2629 = vmax.f32 %v1647, 0.0
      %v2630 = vmax.f32 %v1652, 0.0
      %v2631 = vmax.f32 %v1657, 0.0
      %v2632 = vmax.f32 %v1662, 0.0
      %v2633 = vmax.f32 %v1667, 0.0
      %v2634 = vmax.f32 %v1672, 0.0
      %v2635 = vmax.f32 %v1677, 0.0
      %v2636 = vmax.f32 %v1682, 0.0
      %v2637 = vmax.f32 %v1687, 0.0
      %v2638 = vmax.f32 %v1692, 0.0
      %v2639 = vmax.f32 %v1697, 0.0
      %v2640 = vmax.f32 %v1702, 0.0
      %v2641 = vmax.f32 %v1707, 0.0
      %v2642 = vmax.f32 %v1712, 0.0
      %v2643 = vmax.f32 %v1717, 0.0
      %v2644 = vmax.f32 %v1722, 0.0
      %v2645 = vmax.f32 %v1727, 0.0
      %v2646 = vmax.f32 %v1732, 0.0
      %v2647 = vmax.f32 %v1737, 0.0
      %v2648 = vmax.f32 %v1742, 0.0
      %v2649 = vmax.f32 %v1747, 0.0
      %v2650 = vmax.f32 %v1752, 0.0
      %v2651 = vmax.f32 %v1757, 0.0
      %v2652 = vmax.f32 %v1762, 0.0
      %v2653 = vmax.f32 %v1767, 0.0
      %v2654 = vmax.f32 %v1772, 0.0
      %v2655 = vmax.f32 %v1777, 0.0
      %v2656 = vmax.f32 %v1782, 0.0
      %v2657 = vmax.f32 %v1787, 0.0
      %v2658 = vmax.f32 %v1792, 0.0
      %v2659 = vmax.f32 %v1797, 0.0
      %v2660 = vmax.f32 %v1802, 0.0
      %v2661 = vmax.f32 %v1807, 0.0
      %v2662 = vmax.f32 %v1812, 0.0
      %v2663 = vmax.f32 %v1817, 0.0
      %v2664 = vmax.f32 %v1822, 0.0
      %v2665 = vmax.f32 %v1827, 0.0
      %v2666 = vmax.f32 %v1832, 0.0
      %v2667 = vmax.f32 %v1837, 0.0
      %v2668 = vmax.f32 %v1842, 0.0
      %v2669 = vmax.f32 %v1847, 0.0
      %v2670 = vmax.f32 %v1852, 0.0
      %v2671 = vmax.f32 %v1857, 0.0
      %v2672 = vmax.f32 %v1862, 0.0
      %v2673 = vmax.f32 %v1867, 0.0
      %v2674 = vmax.f32 %v1872, 0.0
      %v2675 = vmax.f32 %v1877, 0.0
      %v2676 = vmax.f32 %v1882, 0.0
      %v2677 = vmax.f32 %v1887, 0.0
      %v2678 = vmax.f32 %v1892, 0.0
      %v2679 = vmax.f32 %v1897, 0.0
      %v2680 = vmax.f32 %v1902, 0.0
      %v2681 = vmax.f32 %v1907, 0.0
      %v2682 = vmax.f32 %v1912, 0.0
      %v2683 = vmax.f32 %v1917, 0.0
      %v2684 = vmax.f32 %v1922, 0.0
      %v2685 = vmax.f32 %v1927, 0.0
      %v2686 = vmax.f32 %v1932, 0.0
      %v2687 = vmax.f32 %v1937, 0.0
      %v2688 = vmax.f32 %v1942, 0.0
      %v2689 = vmax.f32 %v1947, 0.0
      %v2690 = vmax.f32 %v1952, 0.0
      %v2691 = vmax.f32 %v1957, 0.0
      %v2692 = vmax.f32 %v1962, 0.0
      %v2693 = vmax.f32 %v1967, 0.0
      %v2694 = vmax.f32 %v1972, 0.0
      %v2695 = vmax.f32 %v1977, 0.0
      %v2696 = vmax.f32 %v1982, 0.0
      %v2697 = vmax.f32 %v1987, 0.0
      %v2698 = vmax.f32 %v1992, 0.0
      %v2699 = vmax.f32 %v1997, 0.0
      %v2700 = vmax.f32 %v2002, 0.0
      %v2701 = vmax.f32 %v2007, 0.0
      %v2702 = vmax.f32 %v2012, 0.0
      %v2703 = vmax.f32 %v2017, 0.0
      %v2704 = vmax.f32 %v2022, 0.0
      %v2705 = vmax.f32 %v2027, 0.0
      %v2706 = vmax.f32 %v2032, 0.0
      %v2707 = vmax.f32 %v2037, 0.0
      %v2708 = vmax.f32 %v2042, 0.0
      %v2709 = vmax.f32 %v2047, 0.0
      %v2710 = vmax.f32 %v2052, 0.0
      %v2711 = vmax.f32 %v2057, 0.0
      %v2712 = vmax.f32 %v2062, 0.0
      %v2713 = vmax.f32 %v2067, 0.0
      %v2714 = vmax.f32 %v2072, 0.0
      %v2715 = vmax.f32 %v2077, 0.0
      %v2716 = vmax.f32 %v2082, 0.0
      %v2717 = vmax.f32 %v2087, 0.0
      %v2718 = vmax.f32 %v2092, 0.0
      %v2719 = vmax.f32 %v2097, 0.0
      %v2720 = vmax.f32 %v2102, 0.0
      %v2721 = vmax.f32 %v2107, 0.0
      %v2722 = vmax.f32 %v2112, 0.0
      %v2723 = vmax.f32 %v2117, 0.0
      %v2724 = vmax.f32 %v2122, 0.0
      %v2725 = vmax.f32 %v2127, 0.0
      %v2726 = vmax.f32 %v2132, 0.0
      %v2727 = vmax.f32 %v2137, 0.0
      %v2728 = vmax.f32 %v2142, 0.0
      %v2729 = vmax.f32 %v2147, 0.0
      %v2730 = vmax.f32 %v2152, 0.0
      %v2731 = vmax.f32 %v2157, 0.0
      %v2732 = vmax.f32 %v2162, 0.0
      %v2733 = vmax.f32 %v2167, 0.0
      %v2734 = vmax.f32 %v2172, 0.0
      %v2735 = vmax.f32 %v2177, 0.0
      %v2736 = vmax.f32 %v2182, 0.0
      %v2737 = vmax.f32 %v2187, 0.0
      %v2738 = vmax.f32 %v2192, 0.0
      %v2739 = vmax.f32 %v2197, 0.0
      %v2740 = vmax.f32 %v2202, 0.0
      %v2741 = vmax.f32 %v2207, 0.0
      %v2742 = vmax.f32 %v2212, 0.0
      %v2743 = vmax.f32 %v2217, 0.0
      %v2744 = vmax.f32 %v2222, 0.0
      %v2745 = vmax.f32 %v2227, 0.0
      %v2746 = vmax.f32 %v2232, 0.0
      %v2747 = vmax.f32 %v2237, 0.0
      %v2748 = vmax.f32 %v2242, 0.0
      %v2749 = vmax.f32 %v2247, 0.0
      %v2750 = vmax.f32 %v2252, 0.0
      %v2751 = vmax.f32 %v2257, 0.0
      %v2752 = vmax.f32 %v2262, 0.0
      %v2753 = vmax.f32 %v2267, 0.0
      %v2754 = vmax.f32 %v2272, 0.0
      %v2755 = vmax.f32 %v2277, 0.0
      %v2756 = vmax.f32 %v2282, 0.0
      %v2757 = vmax.f32 %v2287, 0.0
      %v2758 = vmax.f32 %v2292, 0.0
      %v2759 = vmax.f32 %v2297, 0.0
      %v2760 = vmax.f32 %v2302, 0.0
      %v2761 = vmax.f32 %v2307, 0.0
      %v2762 = vmax.f32 %v2312, 0.0
      %v2763 = vmax.f32 %v2317, 0.0
      %v2764 = vmax.f32 %v2322, 0.0
      %v2765 = vmax.f32 %v2327, 0.0
      %v2766 = vmax.f32 %v2332, 0.0
      %v2767 = vmax.f32 %v2337, 0.0
      %v2768 = vmax.f32 %v2342, 0.0
      %v2769 = vmax.f32 %v2347, 0.0
      %v2770 = vmax.f32 %v2352, 0.0
      %v2771 = vmax.f32 %v2357, 0.0
      %v2772 = vmax.f32 %v2362, 0.0
      %v2773 = vmax.f32 %v2367, 0.0
      %v2774 = vmax.f32 %v2372, 0.0
      %v2775 = vmax.f32 %v2377, 0.0
      %v2776 = vmax.f32 %v2382, 0.0
      %v2777 = vmax.f32 %v2387, 0.0
      %v2778 = vmax.f32 %v2392, 0.0
      %v2779 = vmax.f32 %v2397, 0.0
      %v2780 = vmax.f32 %v2402, 0.0
      %v2781 = vmax.f32 %v2407, 0.0
      %v2782 = vmax.f32 %v2412, 0.0
      %v2783 = vmax.f32 %v2417, 0.0
      %v2784 = vmax.f32 %v2422, 0.0
      %v2785 = vmax.f32 %v2427, 0.0
      %v2786 = vmax.f32 %v2432, 0.0
      %v2787 = vmax.f32 %v2437, 0.0
      %v2788 = vmax.f32 %v2442, 0.0
      %v2789 = vmax.f32 %v2447, 0.0
      %v2790 = vmax.f32 %v2452, 0.0
      %v2791 = vmax.f32 %v2457, 0.0
      %v2792 = vmax.f32 %v2462, 0.0
      %v2793 = vmax.f32 %v2467, 0.0
      %v2794 = vmax.f32 %v2472, 0.0
      %v2795 = vmax.f32 %v2477, 0.0
      %v2796 = vmax.f32 %v2482, 0.0
      %v2797 = vmax.f32 %v2487, 0.0
      %v2798 = vmax.f32 %v2492, 0.0
      %v2799 = vmax.f32 %v2497, 0.0
      %v2800 = vmax.f32 %v2502, 0.0
      %v2801 = vmax.f32 %v2507, 0.0
      %v2802 = vmax.f32 %v2512, 0.0
      %v2803 = vmax.f32 %v2517, 0.0
      %v2804 = vmax.f32 %v2522, 0.0
      %v2805 = vmax.f32 %v2527, 0.0
      %v2806 = vmax.f32 %v2532, 0.0
      %v2807 = vmax.f32 %v2537, 0.0
      %v2808 = vmax.f32 %v2542, 0.0
      %v2809 = vmax.f32 %v2547, 0.0
      %v2810 = vmax.f32 %v2552, 0.0
      %2811 = vst.msk [vmem:[%s172] sm:$0xff] %vm441, %v2555
      %2812 = vst.msk [vmem:[%s172 + $0x8] sm:$0xff] %vm441, %v2556
      %2813 = vst.msk [vmem:[%s172 + $0x10] sm:$0xff] %vm441, %v2557
      %2814 = vst.msk [vmem:[%s172 + $0x18] sm:$0xff] %vm441, %v2558
      %2815 = vst.msk [vmem:[%s172 + $0x20] sm:$0xff] %vm441, %v2559
      %2816 = vst.msk [vmem:[%s172 + $0x28] sm:$0xff] %vm441, %v2560
      %2817 = vst.msk [vmem:[%s172 + $0x30] sm:$0xff] %vm441, %v2561
      %2818 = vst.msk [vmem:[%s172 + $0x38] sm:$0xff] %vm441, %v2562
      %2819 = vst.msk [vmem:[%s172 + $0x40] sm:$0xff] %vm441, %v2563
      %2820 = vst.msk [vmem:[%s172 + $0x48] sm:$0xff] %vm441, %v2564
      %2821 = vst.msk [vmem:[%s172 + $0x50] sm:$0xff] %vm441, %v2565
      %2822 = vst.msk [vmem:[%s172 + $0x58] sm:$0xff] %vm441, %v2566
      %2823 = vst.msk [vmem:[%s172 + $0x60] sm:$0xff] %vm441, %v2567
      %2824 = vst.msk [vmem:[%s172 + $0x68] sm:$0xff] %vm441, %v2568
      %2825 = vst.msk [vmem:[%s172 + $0x70] sm:$0xff] %vm441, %v2569
      %2826 = vst.msk [vmem:[%s172 + $0x78] sm:$0xff] %vm441, %v2570
      %2827 = vst.msk [vmem:[%s172 + $0x80] sm:$0xff] %vm441, %v2571
      %2828 = vst.msk [vmem:[%s172 + $0x88] sm:$0xff] %vm441, %v2572
      %2829 = vst.msk [vmem:[%s172 + $0x90] sm:$0xff] %vm441, %v2573
      %2830 = vst.msk [vmem:[%s172 + $0x98] sm:$0xff] %vm441, %v2574
      %2831 = vst.msk [vmem:[%s172 + $0xa0] sm:$0xff] %vm441, %v2575
      %2832 = vst.msk [vmem:[%s172 + $0xa8] sm:$0xff] %vm441, %v2576
      %2833 = vst.msk [vmem:[%s172 + $0xb0] sm:$0xff] %vm441, %v2577
      %2834 = vst.msk [vmem:[%s172 + $0xb8] sm:$0xff] %vm441, %v2578
      %2835 = vst.msk [vmem:[%s172 + $0xc0] sm:$0xff] %vm441, %v2579
      %2836 = vst.msk [vmem:[%s172 + $0xc8] sm:$0xff] %vm441, %v2580
      %2837 = vst.msk [vmem:[%s172 + $0xd0] sm:$0xff] %vm441, %v2581
      %2838 = vst.msk [vmem:[%s172 + $0xd8] sm:$0xff] %vm441, %v2582
      %2839 = vst.msk [vmem:[%s172 + $0xe0] sm:$0xff] %vm441, %v2583
      %2840 = vst.msk [vmem:[%s172 + $0xe8] sm:$0xff] %vm441, %v2584
      %2841 = vst.msk [vmem:[%s172 + $0xf0] sm:$0xff] %vm441, %v2585
      %2842 = vst.msk [vmem:[%s172 + $0xf8] sm:$0xff] %vm441, %v2586
      %2843 = vst.msk [vmem:[%s172 + $0x100] sm:$0xff] %vm441, %v2587
      %2844 = vst.msk [vmem:[%s172 + $0x108] sm:$0xff] %vm441, %v2588
      %2845 = vst.msk [vmem:[%s172 + $0x110] sm:$0xff] %vm441, %v2589
      %2846 = vst.msk [vmem:[%s172 + $0x118] sm:$0xff] %vm441, %v2590
      %2847 = vst.msk [vmem:[%s172 + $0x120] sm:$0xff] %vm441, %v2591
      %2848 = vst.msk [vmem:[%s172 + $0x128] sm:$0xff] %vm441, %v2592
      %2849 = vst.msk [vmem:[%s172 + $0x130] sm:$0xff] %vm441, %v2593
      %2850 = vst.msk [vmem:[%s172 + $0x138] sm:$0xff] %vm441, %v2594
      %2851 = vst.msk [vmem:[%s172 + $0x140] sm:$0xff] %vm441, %v2595
      %2852 = vst.msk [vmem:[%s172 + $0x148] sm:$0xff] %vm441, %v2596
      %2853 = vst.msk [vmem:[%s172 + $0x150] sm:$0xff] %vm441, %v2597
      %2854 = vst.msk [vmem:[%s172 + $0x158] sm:$0xff] %vm441, %v2598
      %2855 = vst.msk [vmem:[%s172 + $0x160] sm:$0xff] %vm441, %v2599
      %2856 = vst.msk [vmem:[%s172 + $0x168] sm:$0xff] %vm441, %v2600
      %2857 = vst.msk [vmem:[%s172 + $0x170] sm:$0xff] %vm441, %v2601
      %2858 = vst.msk [vmem:[%s172 + $0x178] sm:$0xff] %vm441, %v2602
      %2859 = vst.msk [vmem:[%s172 + $0x180] sm:$0xff] %vm441, %v2603
      %2860 = vst.msk [vmem:[%s172 + $0x188] sm:$0xff] %vm441, %v2604
      %2861 = vst.msk [vmem:[%s172 + $0x190] sm:$0xff] %vm441, %v2605
      %2862 = vst.msk [vmem:[%s172 + $0x198] sm:$0xff] %vm441, %v2606
      %2863 = vst.msk [vmem:[%s172 + $0x1a0] sm:$0xff] %vm441, %v2607
      %2864 = vst.msk [vmem:[%s172 + $0x1a8] sm:$0xff] %vm441, %v2608
      %2865 = vst.msk [vmem:[%s172 + $0x1b0] sm:$0xff] %vm441, %v2609
      %2866 = vst.msk [vmem:[%s172 + $0x1b8] sm:$0xff] %vm441, %v2610
      %2867 = vst.msk [vmem:[%s172 + $0x1c0] sm:$0xff] %vm441, %v2611
      %2868 = vst.msk [vmem:[%s172 + $0x1c8] sm:$0xff] %vm441, %v2612
      %2869 = vst.msk [vmem:[%s172 + $0x1d0] sm:$0xff] %vm441, %v2613
      %2870 = vst.msk [vmem:[%s172 + $0x1d8] sm:$0xff] %vm441, %v2614
      %2871 = vst.msk [vmem:[%s172 + $0x1e0] sm:$0xff] %vm441, %v2615
      %2872 = vst.msk [vmem:[%s172 + $0x1e8] sm:$0xff] %vm441, %v2616
      %2873 = vst.msk [vmem:[%s172 + $0x1f0] sm:$0xff] %vm441, %v2617
      %2874 = vst.msk [vmem:[%s172 + $0x1f8] sm:$0xff] %vm441, %v2618
      %2875 = vst.msk [vmem:[%s172 + $0x200] sm:$0xff] %vm441, %v2619
      %2876 = vst.msk [vmem:[%s172 + $0x208] sm:$0xff] %vm441, %v2620
      %2877 = vst.msk [vmem:[%s172 + $0x210] sm:$0xff] %vm441, %v2621
      %2878 = vst.msk [vmem:[%s172 + $0x218] sm:$0xff] %vm441, %v2622
      %2879 = vst.msk [vmem:[%s172 + $0x220] sm:$0xff] %vm441, %v2623
      %2880 = vst.msk [vmem:[%s172 + $0x228] sm:$0xff] %vm441, %v2624
      %2881 = vst.msk [vmem:[%s172 + $0x230] sm:$0xff] %vm441, %v2625
      %2882 = vst.msk [vmem:[%s172 + $0x238] sm:$0xff] %vm441, %v2626
      %2883 = vst.msk [vmem:[%s172 + $0x240] sm:$0xff] %vm441, %v2627
      %2884 = vst.msk [vmem:[%s172 + $0x248] sm:$0xff] %vm441, %v2628
      %2885 = vst.msk [vmem:[%s172 + $0x250] sm:$0xff] %vm441, %v2629
      %2886 = vst.msk [vmem:[%s172 + $0x258] sm:$0xff] %vm441, %v2630
      %2887 = vst.msk [vmem:[%s172 + $0x260] sm:$0xff] %vm441, %v2631
      %2888 = vst.msk [vmem:[%s172 + $0x268] sm:$0xff] %vm441, %v2632
      %2889 = vst.msk [vmem:[%s172 + $0x270] sm:$0xff] %vm441, %v2633
      %2890 = vst.msk [vmem:[%s172 + $0x278] sm:$0xff] %vm441, %v2634
      %2891 = vst.msk [vmem:[%s172 + $0x280] sm:$0xff] %vm441, %v2635
      %2892 = vst.msk [vmem:[%s172 + $0x288] sm:$0xff] %vm441, %v2636
      %2893 = vst.msk [vmem:[%s172 + $0x290] sm:$0xff] %vm441, %v2637
      %2894 = vst.msk [vmem:[%s172 + $0x298] sm:$0xff] %vm441, %v2638
      %2895 = vst.msk [vmem:[%s172 + $0x2a0] sm:$0xff] %vm441, %v2639
      %2896 = vst.msk [vmem:[%s172 + $0x2a8] sm:$0xff] %vm441, %v2640
      %2897 = vst.msk [vmem:[%s172 + $0x2b0] sm:$0xff] %vm441, %v2641
      %2898 = vst.msk [vmem:[%s172 + $0x2b8] sm:$0xff] %vm441, %v2642
      %2899 = vst.msk [vmem:[%s172 + $0x2c0] sm:$0xff] %vm441, %v2643
      %2900 = vst.msk [vmem:[%s172 + $0x2c8] sm:$0xff] %vm441, %v2644
      %2901 = vst.msk [vmem:[%s172 + $0x2d0] sm:$0xff] %vm441, %v2645
      %2902 = vst.msk [vmem:[%s172 + $0x2d8] sm:$0xff] %vm441, %v2646
      %2903 = vst.msk [vmem:[%s172 + $0x2e0] sm:$0xff] %vm441, %v2647
      %2904 = vst.msk [vmem:[%s172 + $0x2e8] sm:$0xff] %vm441, %v2648
      %2905 = vst.msk [vmem:[%s172 + $0x2f0] sm:$0xff] %vm441, %v2649
      %2906 = vst.msk [vmem:[%s172 + $0x2f8] sm:$0xff] %vm441, %v2650
      %2907 = vst.msk [vmem:[%s172 + $0x300] sm:$0xff] %vm441, %v2651
      %2908 = vst.msk [vmem:[%s172 + $0x308] sm:$0xff] %vm441, %v2652
      %2909 = vst.msk [vmem:[%s172 + $0x310] sm:$0xff] %vm441, %v2653
      %2910 = vst.msk [vmem:[%s172 + $0x318] sm:$0xff] %vm441, %v2654
      %2911 = vst.msk [vmem:[%s172 + $0x320] sm:$0xff] %vm441, %v2655
      %2912 = vst.msk [vmem:[%s172 + $0x328] sm:$0xff] %vm441, %v2656
      %2913 = vst.msk [vmem:[%s172 + $0x330] sm:$0xff] %vm441, %v2657
      %2914 = vst.msk [vmem:[%s172 + $0x338] sm:$0xff] %vm441, %v2658
      %2915 = vst.msk [vmem:[%s172 + $0x340] sm:$0xff] %vm441, %v2659
      %2916 = vst.msk [vmem:[%s172 + $0x348] sm:$0xff] %vm441, %v2660
      %2917 = vst.msk [vmem:[%s172 + $0x350] sm:$0xff] %vm441, %v2661
      %2918 = vst.msk [vmem:[%s172 + $0x358] sm:$0xff] %vm441, %v2662
      %2919 = vst.msk [vmem:[%s172 + $0x360] sm:$0xff] %vm441, %v2663
      %2920 = vst.msk [vmem:[%s172 + $0x368] sm:$0xff] %vm441, %v2664
      %2921 = vst.msk [vmem:[%s172 + $0x370] sm:$0xff] %vm441, %v2665
      %2922 = vst.msk [vmem:[%s172 + $0x378] sm:$0xff] %vm441, %v2666
      %2923 = vst.msk [vmem:[%s172 + $0x380] sm:$0xff] %vm441, %v2667
      %2924 = vst.msk [vmem:[%s172 + $0x388] sm:$0xff] %vm441, %v2668
      %2925 = vst.msk [vmem:[%s172 + $0x390] sm:$0xff] %vm441, %v2669
      %2926 = vst.msk [vmem:[%s172 + $0x398] sm:$0xff] %vm441, %v2670
      %2927 = vst.msk [vmem:[%s172 + $0x3a0] sm:$0xff] %vm441, %v2671
      %2928 = vst.msk [vmem:[%s172 + $0x3a8] sm:$0xff] %vm441, %v2672
      %2929 = vst.msk [vmem:[%s172 + $0x3b0] sm:$0xff] %vm441, %v2673
      %2930 = vst.msk [vmem:[%s172 + $0x3b8] sm:$0xff] %vm441, %v2674
      %2931 = vst.msk [vmem:[%s172 + $0x3c0] sm:$0xff] %vm441, %v2675
      %2932 = vst.msk [vmem:[%s172 + $0x3c8] sm:$0xff] %vm441, %v2676
      %2933 = vst.msk [vmem:[%s172 + $0x3d0] sm:$0xff] %vm441, %v2677
      %2934 = vst.msk [vmem:[%s172 + $0x3d8] sm:$0xff] %vm441, %v2678
      %2935 = vst.msk [vmem:[%s172 + $0x3e0] sm:$0xff] %vm441, %v2679
      %2936 = vst.msk [vmem:[%s172 + $0x3e8] sm:$0xff] %vm441, %v2680
      %2937 = vst.msk [vmem:[%s172 + $0x3f0] sm:$0xff] %vm441, %v2681
      %2938 = vst.msk [vmem:[%s172 + $0x3f8] sm:$0xff] %vm441, %v2682
      %2939 = vst.msk [vmem:[%s172 + $0x400] sm:$0xff] %vm441, %v2683
      %2940 = vst.msk [vmem:[%s172 + $0x408] sm:$0xff] %vm441, %v2684
      %2941 = vst.msk [vmem:[%s172 + $0x410] sm:$0xff] %vm441, %v2685
      %2942 = vst.msk [vmem:[%s172 + $0x418] sm:$0xff] %vm441, %v2686
      %2943 = vst.msk [vmem:[%s172 + $0x420] sm:$0xff] %vm441, %v2687
      %2944 = vst.msk [vmem:[%s172 + $0x428] sm:$0xff] %vm441, %v2688
      %2945 = vst.msk [vmem:[%s172 + $0x430] sm:$0xff] %vm441, %v2689
      %2946 = vst.msk [vmem:[%s172 + $0x438] sm:$0xff] %vm441, %v2690
      %2947 = vst.msk [vmem:[%s172 + $0x440] sm:$0xff] %vm441, %v2691
      %2948 = vst.msk [vmem:[%s172 + $0x448] sm:$0xff] %vm441, %v2692
      %2949 = vst.msk [vmem:[%s172 + $0x450] sm:$0xff] %vm441, %v2693
      %2950 = vst.msk [vmem:[%s172 + $0x458] sm:$0xff] %vm441, %v2694
      %2951 = vst.msk [vmem:[%s172 + $0x460] sm:$0xff] %vm441, %v2695
      %2952 = vst.msk [vmem:[%s172 + $0x468] sm:$0xff] %vm441, %v2696
      %2953 = vst.msk [vmem:[%s172 + $0x470] sm:$0xff] %vm441, %v2697
      %2954 = vst.msk [vmem:[%s172 + $0x478] sm:$0xff] %vm441, %v2698
      %2955 = vst.msk [vmem:[%s172 + $0x480] sm:$0xff] %vm441, %v2699
      %2956 = vst.msk [vmem:[%s172 + $0x488] sm:$0xff] %vm441, %v2700
      %2957 = vst.msk [vmem:[%s172 + $0x490] sm:$0xff] %vm441, %v2701
      %2958 = vst.msk [vmem:[%s172 + $0x498] sm:$0xff] %vm441, %v2702
      %2959 = vst.msk [vmem:[%s172 + $0x4a0] sm:$0xff] %vm441, %v2703
      %2960 = vst.msk [vmem:[%s172 + $0x4a8] sm:$0xff] %vm441, %v2704
      %2961 = vst.msk [vmem:[%s172 + $0x4b0] sm:$0xff] %vm441, %v2705
      %2962 = vst.msk [vmem:[%s172 + $0x4b8] sm:$0xff] %vm441, %v2706
      %2963 = vst.msk [vmem:[%s172 + $0x4c0] sm:$0xff] %vm441, %v2707
      %2964 = vst.msk [vmem:[%s172 + $0x4c8] sm:$0xff] %vm441, %v2708
      %2965 = vst.msk [vmem:[%s172 + $0x4d0] sm:$0xff] %vm441, %v2709
      %2966 = vst.msk [vmem:[%s172 + $0x4d8] sm:$0xff] %vm441, %v2710
      %2967 = vst.msk [vmem:[%s172 + $0x4e0] sm:$0xff] %vm441, %v2711
      %2968 = vst.msk [vmem:[%s172 + $0x4e8] sm:$0xff] %vm441, %v2712
      %2969 = vst.msk [vmem:[%s172 + $0x4f0] sm:$0xff] %vm441, %v2713
      %2970 = vst.msk [vmem:[%s172 + $0x4f8] sm:$0xff] %vm441, %v2714
      %2971 = vst.msk [vmem:[%s172 + $0x500] sm:$0xff] %vm441, %v2715
      %2972 = vst.msk [vmem:[%s172 + $0x508] sm:$0xff] %vm441, %v2716
      %2973 = vst.msk [vmem:[%s172 + $0x510] sm:$0xff] %vm441, %v2717
      %2974 = vst.msk [vmem:[%s172 + $0x518] sm:$0xff] %vm441, %v2718
      %2975 = vst.msk [vmem:[%s172 + $0x520] sm:$0xff] %vm441, %v2719
      %2976 = vst.msk [vmem:[%s172 + $0x528] sm:$0xff] %vm441, %v2720
      %2977 = vst.msk [vmem:[%s172 + $0x530] sm:$0xff] %vm441, %v2721
      %2978 = vst.msk [vmem:[%s172 + $0x538] sm:$0xff] %vm441, %v2722
      %2979 = vst.msk [vmem:[%s172 + $0x540] sm:$0xff] %vm441, %v2723
      %2980 = vst.msk [vmem:[%s172 + $0x548] sm:$0xff] %vm441, %v2724
      %2981 = vst.msk [vmem:[%s172 + $0x550] sm:$0xff] %vm441, %v2725
      %2982 = vst.msk [vmem:[%s172 + $0x558] sm:$0xff] %vm441, %v2726
      %2983 = vst.msk [vmem:[%s172 + $0x560] sm:$0xff] %vm441, %v2727
      %2984 = vst.msk [vmem:[%s172 + $0x568] sm:$0xff] %vm441, %v2728
      %2985 = vst.msk [vmem:[%s172 + $0x570] sm:$0xff] %vm441, %v2729
      %2986 = vst.msk [vmem:[%s172 + $0x578] sm:$0xff] %vm441, %v2730
      %2987 = vst.msk [vmem:[%s172 + $0x580] sm:$0xff] %vm441, %v2731
      %2988 = vst.msk [vmem:[%s172 + $0x588] sm:$0xff] %vm441, %v2732
      %2989 = vst.msk [vmem:[%s172 + $0x590] sm:$0xff] %vm441, %v2733
      %2990 = vst.msk [vmem:[%s172 + $0x598] sm:$0xff] %vm441, %v2734
      %2991 = vst.msk [vmem:[%s172 + $0x5a0] sm:$0xff] %vm441, %v2735
      %2992 = vst.msk [vmem:[%s172 + $0x5a8] sm:$0xff] %vm441, %v2736
      %2993 = vst.msk [vmem:[%s172 + $0x5b0] sm:$0xff] %vm441, %v2737
      %2994 = vst.msk [vmem:[%s172 + $0x5b8] sm:$0xff] %vm441, %v2738
      %2995 = vst.msk [vmem:[%s172 + $0x5c0] sm:$0xff] %vm441, %v2739
      %2996 = vst.msk [vmem:[%s172 + $0x5c8] sm:$0xff] %vm441, %v2740
      %2997 = vst.msk [vmem:[%s172 + $0x5d0] sm:$0xff] %vm441, %v2741
      %2998 = vst.msk [vmem:[%s172 + $0x5d8] sm:$0xff] %vm441, %v2742
      %2999 = vst.msk [vmem:[%s172 + $0x5e0] sm:$0xff] %vm441, %v2743
      %3000 = vst.msk [vmem:[%s172 + $0x5e8] sm:$0xff] %vm441, %v2744
      %3001 = vst.msk [vmem:[%s172 + $0x5f0] sm:$0xff] %vm441, %v2745
      %3002 = vst.msk [vmem:[%s172 + $0x5f8] sm:$0xff] %vm441, %v2746
      %3003 = vst.msk [vmem:[%s172 + $0x600] sm:$0xff] %vm441, %v2747
      %3004 = vst.msk [vmem:[%s172 + $0x608] sm:$0xff] %vm441, %v2748
      %3005 = vst.msk [vmem:[%s172 + $0x610] sm:$0xff] %vm441, %v2749
      %3006 = vst.msk [vmem:[%s172 + $0x618] sm:$0xff] %vm441, %v2750
      %3007 = vst.msk [vmem:[%s172 + $0x620] sm:$0xff] %vm441, %v2751
      %3008 = vst.msk [vmem:[%s172 + $0x628] sm:$0xff] %vm441, %v2752
      %3009 = vst.msk [vmem:[%s172 + $0x630] sm:$0xff] %vm441, %v2753
      %3010 = vst.msk [vmem:[%s172 + $0x638] sm:$0xff] %vm441, %v2754
      %3011 = vst.msk [vmem:[%s172 + $0x640] sm:$0xff] %vm441, %v2755
      %3012 = vst.msk [vmem:[%s172 + $0x648] sm:$0xff] %vm441, %v2756
      %3013 = vst.msk [vmem:[%s172 + $0x650] sm:$0xff] %vm441, %v2757
      %3014 = vst.msk [vmem:[%s172 + $0x658] sm:$0xff] %vm441, %v2758
      %3015 = vst.msk [vmem:[%s172 + $0x660] sm:$0xff] %vm441, %v2759
      %3016 = vst.msk [vmem:[%s172 + $0x668] sm:$0xff] %vm441, %v2760
      %3017 = vst.msk [vmem:[%s172 + $0x670] sm:$0xff] %vm441, %v2761
      %3018 = vst.msk [vmem:[%s172 + $0x678] sm:$0xff] %vm441, %v2762
      %3019 = vst.msk [vmem:[%s172 + $0x680] sm:$0xff] %vm441, %v2763
      %3020 = vst.msk [vmem:[%s172 + $0x688] sm:$0xff] %vm441, %v2764
      %3021 = vst.msk [vmem:[%s172 + $0x690] sm:$0xff] %vm441, %v2765
      %3022 = vst.msk [vmem:[%s172 + $0x698] sm:$0xff] %vm441, %v2766
      %3023 = vst.msk [vmem:[%s172 + $0x6a0] sm:$0xff] %vm441, %v2767
      %3024 = vst.msk [vmem:[%s172 + $0x6a8] sm:$0xff] %vm441, %v2768
      %3025 = vst.msk [vmem:[%s172 + $0x6b0] sm:$0xff] %vm441, %v2769
      %3026 = vst.msk [vmem:[%s172 + $0x6b8] sm:$0xff] %vm441, %v2770
      %3027 = vst.msk [vmem:[%s172 + $0x6c0] sm:$0xff] %vm441, %v2771
      %3028 = vst.msk [vmem:[%s172 + $0x6c8] sm:$0xff] %vm441, %v2772
      %3029 = vst.msk [vmem:[%s172 + $0x6d0] sm:$0xff] %vm441, %v2773
      %3030 = vst.msk [vmem:[%s172 + $0x6d8] sm:$0xff] %vm441, %v2774
      %3031 = vst.msk [vmem:[%s172 + $0x6e0] sm:$0xff] %vm441, %v2775
      %3032 = vst.msk [vmem:[%s172 + $0x6e8] sm:$0xff] %vm441, %v2776
      %3033 = vst.msk [vmem:[%s172 + $0x6f0] sm:$0xff] %vm441, %v2777
      %3034 = vst.msk [vmem:[%s172 + $0x6f8] sm:$0xff] %vm441, %v2778
      %3035 = vst.msk [vmem:[%s172 + $0x700] sm:$0xff] %vm441, %v2779
      %3036 = vst.msk [vmem:[%s172 + $0x708] sm:$0xff] %vm441, %v2780
      %3037 = vst.msk [vmem:[%s172 + $0x710] sm:$0xff] %vm441, %v2781
      %3038 = vst.msk [vmem:[%s172 + $0x718] sm:$0xff] %vm441, %v2782
      %3039 = vst.msk [vmem:[%s172 + $0x720] sm:$0xff] %vm441, %v2783
      %3040 = vst.msk [vmem:[%s172 + $0x728] sm:$0xff] %vm441, %v2784
      %3041 = vst.msk [vmem:[%s172 + $0x730] sm:$0xff] %vm441, %v2785
      %3042 = vst.msk [vmem:[%s172 + $0x738] sm:$0xff] %vm441, %v2786
      %3043 = vst.msk [vmem:[%s172 + $0x740] sm:$0xff] %vm441, %v2787
      %3044 = vst.msk [vmem:[%s172 + $0x748] sm:$0xff] %vm441, %v2788
      %3045 = vst.msk [vmem:[%s172 + $0x750] sm:$0xff] %vm441, %v2789
      %3046 = vst.msk [vmem:[%s172 + $0x758] sm:$0xff] %vm441, %v2790
      %3047 = vst.msk [vmem:[%s172 + $0x760] sm:$0xff] %vm441, %v2791
      %3048 = vst.msk [vmem:[%s172 + $0x768] sm:$0xff] %vm441, %v2792
      %3049 = vst.msk [vmem:[%s172 + $0x770] sm:$0xff] %vm441, %v2793
      %3050 = vst.msk [vmem:[%s172 + $0x778] sm:$0xff] %vm441, %v2794
      %3051 = vst.msk [vmem:[%s172 + $0x780] sm:$0xff] %vm441, %v2795
      %3052 = vst.msk [vmem:[%s172 + $0x788] sm:$0xff] %vm441, %v2796
      %3053 = vst.msk [vmem:[%s172 + $0x790] sm:$0xff] %vm441, %v2797
      %3054 = vst.msk [vmem:[%s172 + $0x798] sm:$0xff] %vm441, %v2798
      %3055 = vst.msk [vmem:[%s172 + $0x7a0] sm:$0xff] %vm441, %v2799
      %3056 = vst.msk [vmem:[%s172 + $0x7a8] sm:$0xff] %vm441, %v2800
      %3057 = vst.msk [vmem:[%s172 + $0x7b0] sm:$0xff] %vm441, %v2801
      %3058 = vst.msk [vmem:[%s172 + $0x7b8] sm:$0xff] %vm441, %v2802
      %3059 = vst.msk [vmem:[%s172 + $0x7c0] sm:$0xff] %vm441, %v2803
      %3060 = vst.msk [vmem:[%s172 + $0x7c8] sm:$0xff] %vm441, %v2804
      %3061 = vst.msk [vmem:[%s172 + $0x7d0] sm:$0xff] %vm441, %v2805
      %3062 = vst.msk [vmem:[%s172 + $0x7d8] sm:$0xff] %vm441, %v2806
      %3063 = vst.msk [vmem:[%s172 + $0x7e0] sm:$0xff] %vm441, %v2807
      %3064 = vst.msk [vmem:[%s172 + $0x7e8] sm:$0xff] %vm441, %v2808
      %3065 = vst.msk [vmem:[%s172 + $0x7f0] sm:$0xff] %vm441, %v2809
      %3066 = vst.msk [vmem:[%s172 + $0x7f8] sm:$0xff] %vm441, %v2810
      %s3067 = smul.u32 256, %s14
      %p3068 = scmp.lt.s32.totalorder %s3067, 511
      %s3069 = scalar_select %p3068, %s3067, 511
      %s3070 = smul.addr %s3069, 8
      %s3071 = scalar_lea.vmem %s3, %s3070
      // Predicated region
      $region33: #{tpu_custom_call.1} parent=31 // pred_check
        %p3072 = pneg %p100
      $region34: #{tpu_custom_call.1} parent=31 // pred_check_branch
        %3074 = sbr.rel (%p3072) target = $region36
      $region35: #{tpu_custom_call.1} parent=31 // pred_region
        %s3075 = smul.u32 256, %s14
      $region36: #{tpu_custom_call.1} parent=31 // pred_fallthru
        _
    $region32: #{tpu_custom_call.1} parent=5 // pred_fallthru
      _
    %p3076 = scmp.le.s32.totalorder 2, %s9
    // Predicated region
    $region37: #{tpu_custom_call.1} parent=5 // pred_check
      %p3077 = pneg %p3076
    $region38: #{tpu_custom_call.1} parent=5 // pred_check_branch
      %3079 = sbr.rel (%p3077) target = $region40
    $region39: #{tpu_custom_call.1} parent=5 // pred_region
      %s3080 = ssub.s32 %s9, 2
      // Predicated region
      $region41: #{tpu_custom_call.1} parent=39 // pred_check
        %p3081 = pneg %p106
      $region42: #{tpu_custom_call.1} parent=39 // pred_check_branch
        %3083 = sbr.rel (%p3081) target = $region44
      $region43: #{tpu_custom_call.1} parent=39 // pred_region
        %s3084 = smul.u32 256, %s15
        %p3085 = scmp.lt.s32.totalorder %s3084, 511
        %s3086 = scalar_select %p3085, %s3084, 511
        %s3087 = smul.addr %s3086, 8
        %s3088 = scalar_lea.vmem %s3, %s3087
      $region44: #{tpu_custom_call.1} parent=39 // pred_fallthru
        _
    $region40: #{tpu_custom_call.1} parent=5 // pred_fallthru
      _
  $region6: #{tpu_custom_call.1} parent=0 // loop_footer
    %s13 = sadd.s32 1, %s9
  $region7: #{tpu_custom_call.1} parent=0 // loop_footer_branch
    %8 = sbr.rel target = $region3
  $region8: #{tpu_custom_call.1} parent=0 // loop_exit
    _

</llo_original>
